<compile_context>
chip_gen: v5e
topology: v5e:2x2
jax: 0.10.0
libtpu: 0.0.40
codegen_flags: <defaults>
</compile_context>

<pallas_src>
import jax
import jax.numpy as jnp
from jax import lax
from jax.experimental import pallas as pl
from jax.experimental.pallas import tpu as pltpu


def _round_up(x, m):
    return ((x + m - 1) // m) * m


def _fold_bn(gamma, beta, running_mean, running_var, eps=1e-5):
    scale = gamma / jnp.sqrt(running_var + eps)
    bias = beta - running_mean * scale
    return scale, bias


def _upsample_pad_flatten_operator(h, w, Wp, HS, Ltot):
    """(h*w, Ltot) 0/1 matrix G: (x_flat @ G) is the 2x-nearest-upsampled image,
    zero-padded by 1, flattened row-major at lane offset HS (head/tail slack and
    the padding ring are zero).  0/1 entries are exact in bf16."""
    H, W = 2 * h, 2 * w
    i = jnp.arange(H)
    j = jnp.arange(W)
    q = HS + (i[:, None] + 1) * Wp + (j[None, :] + 1)   # destination flat index
    s = (i[:, None] // 2) * w + (j[None, :] // 2)       # nearest-neighbour source
    g = jnp.zeros((h * w, Ltot), jnp.float32)
    g = g.at[s.ravel(), q.ravel()].set(1.0)
    return g.astype(jnp.bfloat16)


def _conv_weight_to_matmul(w_oihw, c_in_pad, c_out_pad):
    """(Cout, Cin, 3, 3) OIHW -> (c_out_pad, 9*c_in_pad), tap-major / channel-minor
    column order matching the in-kernel im2col patch stacking."""
    c_out, c_in = w_oihw.shape[0], w_oihw.shape[1]
    w = jnp.transpose(w_oihw, (0, 2, 3, 1))              # (Cout, kh, kw, Cin)
    w = jnp.pad(w, ((0, c_out_pad - c_out), (0, 0), (0, 0), (0, c_in_pad - c_in)))
    return w.reshape(c_out_pad, 9 * c_in_pad).astype(jnp.bfloat16)


def decoder_block_forward(x_nchw, params):
    """Matches DecoderBlock.forward: (N, Cin, h, w) -> (N, Cout, 2h, 2w), NCHW."""
    N, c_in, h, w = x_nchw.shape
    c_out = params["w1"].shape[0]
    H, W = 2 * h, 2 * w
    Hp, Wp = H + 2, W + 2                       # padded (by 1) upsampled image
    NPOS = Hp * Wp                              # flattened padded positions
    HS = _round_up(Wp + 1, 128)                 # head slack (covers negative taps)
    LTOT = HS + _round_up(NPOS + Wp + 1, 128)   # + tail slack, lane-aligned total
    CI = _round_up(c_in, 8)                     # sublane-aligned channel counts
    CO = _round_up(c_out, 8)

    # ---- constants / folded parameters (tiny, computed once in XLA) ---------
    g_op = _upsample_pad_flatten_operator(h, w, Wp, HS, LTOT)   # (h*w, LTOT) bf16
    w1m = _conv_weight_to_matmul(params["w1"], CI, CO)          # (CO, 9*CI)  bf16
    w2m = _conv_weight_to_matmul(params["w2"], CO, CO)          # (CO, 9*CO)  bf16

    s1, b1 = _fold_bn(params["gamma1"], params["beta1"], params["mean1"], params["var1"])
    s2, b2 = _fold_bn(params["gamma2"], params["beta2"], params["mean2"], params["var2"])

    def _pad_col(v):
        return jnp.pad(v.astype(jnp.float32), (0, CO - c_out)).reshape(CO, 1)

    s1c, b1c, s2c, b2c = _pad_col(s1), _pad_col(b1), _pad_col(s2), _pad_col(b2)

    # interior mask over the padded-flat layout (re-zeros the ring before conv2)
    r = jnp.arange(Hp)
    c = jnp.arange(Wp)
    interior = ((r[:, None] >= 1) & (r[:, None] <= H) &
                (c[None, :] >= 1) & (c[None, :] <= W))
    mask = interior.astype(jnp.float32).reshape(1, NPOS)

    # flattened, channel-padded, bf16 input (reshape is free in HBM)
    x_flat = jnp.pad(x_nchw.reshape(N, c_in, h * w),
                     ((0, 0), (0, CI - c_in), (0, 0))).astype(jnp.bfloat16)

    # ---- fused kernel: upsample -> conv1+BN+ReLU -> conv2+BN+ReLU -----------
    def kernel(x_ref, g_ref, w1_ref, w2_ref, s1_ref, b1_ref, s2_ref, b2_ref,
               m_ref, o_ref, buf_ref):
        # 2x nearest upsample + zero pad + flatten as one 0/1 MXU matmul (exact).
        buf1 = jnp.dot(x_ref[0], g_ref[...],
                       preferred_element_type=jnp.float32)          # (CI, LTOT) f32

        def conv3x3(w_mat, tap_fn):
            # im2col: 9 lane-shifted views stacked on the contraction axis,
            # single bf16 matmul with f32 accumulation.
            taps = []
            for kh in range(3):
                for kw in range(3):
                    start = HS + (kh - 1) * Wp + (kw - 1)
                    taps.append(tap_fn(start))                      # (C, NPOS)
            patches = jnp.concatenate(taps, axis=0).astype(jnp.bfloat16)
            return jnp.dot(w_mat, patches,
                           preferred_element_type=jnp.float32)      # (CO, NPOS) f32

        acc1 = conv3x3(w1_ref[...], lambda s: buf1[:, s:s + NPOS])
        y1 = jnp.maximum(acc1 * s1_ref[...] + b1_ref[...], 0.0)     # folded BN + ReLU
        y1 = y1 * m_ref[...]                                        # zero padding ring

        # conv1 activation (padded flat layout) into VMEM scratch for conv2.
        buf_ref[:, :HS] = jnp.zeros((CO, HS), jnp.float32)
        buf_ref[:, HS:HS + NPOS] = y1
        buf_ref[:, HS + NPOS:] = jnp.zeros((CO, LTOT - HS - NPOS), jnp.float32)

        acc2 = conv3x3(w2_ref[...], lambda s: buf_ref[:, s:s + NPOS])
        y2 = jnp.maximum(acc2 * s2_ref[...] + b2_ref[...], 0.0)
        o_ref[0] = y2                                               # lane-dense store

    out_flat = pl.pallas_call(
        kernel,
        out_shape=jax.ShapeDtypeStruct((N, CO, NPOS), jnp.float32),
        grid=(N,),
        in_specs=[
            pl.BlockSpec((1, CI, h * w), lambda n: (n, 0, 0)),      # x (flattened)
            pl.BlockSpec((h * w, LTOT), lambda n: (0, 0)),          # upsample/pad op
            pl.BlockSpec((CO, 9 * CI), lambda n: (0, 0)),           # W1 (matmul form)
            pl.BlockSpec((CO, 9 * CO), lambda n: (0, 0)),           # W2 (matmul form)
            pl.BlockSpec((CO, 1), lambda n: (0, 0)),                # BN1 scale
            pl.BlockSpec((CO, 1), lambda n: (0, 0)),                # BN1 bias
            pl.BlockSpec((CO, 1), lambda n: (0, 0)),                # BN2 scale
            pl.BlockSpec((CO, 1), lambda n: (0, 0)),                # BN2 bias
            pl.BlockSpec((1, NPOS), lambda n: (0, 0)),              # interior mask
        ],
        out_specs=pl.BlockSpec((1, CO, NPOS), lambda n: (n, 0, 0)),
        scratch_shapes=[pltpu.VMEM((CO, LTOT), jnp.float32)],
        compiler_params=pltpu.CompilerParams(
            dimension_semantics=("parallel",)),
    )(x_flat, g_op, w1m, w2m, s1c, b1c, s2c, b2c, mask)

    # free reshape + crop of padding ring / channel padding -> NCHW output
    out = out_flat.reshape(N, CO, Hp, Wp)[:, :c_out, 1:H + 1, 1:W + 1]
    return out


def make_decoder_block_params(key, in_channels, out_channels):
    """Deterministic synthetic parameters (Conv has no bias, as in Conv-BN)."""
    ks = jax.random.split(key, 10)
    p = {}
    p["w1"] = 0.1 * jax.random.normal(ks[0], (out_channels, in_channels, 3, 3), jnp.float32)
    p["gamma1"] = 0.5 + jax.random.uniform(ks[1], (out_channels,), jnp.float32)
    p["beta1"] = 0.1 * jax.random.normal(ks[2], (out_channels,), jnp.float32)
    p["mean1"] = 0.1 * jax.random.normal(ks[3], (out_channels,), jnp.float32)
    p["var1"] = 0.5 + jax.random.uniform(ks[4], (out_channels,), jnp.float32)
    p["w2"] = 0.1 * jax.random.normal(ks[5], (out_channels, out_channels, 3, 3), jnp.float32)
    p["gamma2"] = 0.5 + jax.random.uniform(ks[6], (out_channels,), jnp.float32)
    p["beta2"] = 0.1 * jax.random.normal(ks[7], (out_channels,), jnp.float32)
    p["mean2"] = 0.1 * jax.random.normal(ks[8], (out_channels,), jnp.float32)
    p["var2"] = 0.5 + jax.random.uniform(ks[9], (out_channels,), jnp.float32)
    return p


def _reference_forward(x_nchw, params):
    """Pure-JAX reference with matching bf16 operand rounding (f32 accumulation)."""
    x = jnp.repeat(jnp.repeat(x_nchw.astype(jnp.float32), 2, axis=2), 2, axis=3)

    def cbr(x, w_oihw, gamma, beta, mean, var):
        y = lax.conv_general_dilated(
            x.astype(jnp.bfloat16), w_oihw.astype(jnp.bfloat16),
            window_strides=(1, 1), padding="SAME",
            dimension_numbers=("NCHW", "OIHW", "NCHW"),
            preferred_element_type=jnp.float32)
        s, b = _fold_bn(gamma, beta, mean, var)
        return jnp.maximum(y * s[None, :, None, None] + b[None, :, None, None], 0.0)

    y = cbr(x, params["w1"], params["gamma1"], params["beta1"], params["mean1"], params["var1"])
    y = cbr(y, params["w2"], params["gamma2"], params["beta2"], params["mean2"], params["var2"])
    return y


if __name__ == "__main__":
    key = jax.random.PRNGKey(0)
    k_x, k_p = jax.random.split(key)

    in_channels, out_channels = 4, 8
    x = jax.random.normal(k_x, (2, in_channels, 16, 16), jnp.float32)   # NCHW
    params = make_decoder_block_params(k_p, in_channels, out_channels)

    fwd = jax.jit(decoder_block_forward)
    out = jax.block_until_ready(fwd(x, params))

    ref = jax.block_until_ready(_reference_forward(x, params))
    assert out.shape == (2, out_channels, 32, 32), out.shape
    max_err = float(jnp.max(jnp.abs(out - ref)))
    assert jnp.allclose(out, ref, rtol=5e-3, atol=5e-3), (
        f"mismatch vs reference (max abs err {max_err})")

    print("KERNEL_OK")
</pallas_src>

<mosaic_0001>
module attributes {stable_mosaic.version = 11 : i64} {
  func.func @kernel(%arg0: i32, %arg1: memref<1x8x256xbf16, #tpu.memory_space<vmem>>, %arg2: memref<256x1408xbf16, #tpu.memory_space<vmem>>, %arg3: memref<8x72xbf16, #tpu.memory_space<vmem>>, %arg4: memref<8x72xbf16, #tpu.memory_space<vmem>>, %arg5: memref<8x1xf32, #tpu.memory_space<vmem>>, %arg6: memref<8x1xf32, #tpu.memory_space<vmem>>, %arg7: memref<8x1xf32, #tpu.memory_space<vmem>>, %arg8: memref<8x1xf32, #tpu.memory_space<vmem>>, %arg9: memref<1x1156xf32, #tpu.memory_space<vmem>>, %arg10: memref<1x8x1156xf32, #tpu.memory_space<vmem>>, %arg11: memref<8x1408xf32, #tpu.memory_space<vmem>>) attributes {dimension_semantics = [#tpu.dimension_semantics<parallel>], iteration_bounds = array<i64: 2>, scalar_prefetch = 0 : i64, scratch_operands = 1 : i64, tpu.core_type = #tpu.core_type<tc>, window_params = [{transform_indices = @transform_0, window_bounds = array<i64: 1, 8, 256>}, {pipeline_mode = #tpu.pipeline_mode<synchronous>, transform_indices = @transform_1, window_bounds = array<i64: 256, 1408>}, {pipeline_mode = #tpu.pipeline_mode<synchronous>, transform_indices = @transform_2, window_bounds = array<i64: 8, 72>}, {pipeline_mode = #tpu.pipeline_mode<synchronous>, transform_indices = @transform_3, window_bounds = array<i64: 8, 72>}, {pipeline_mode = #tpu.pipeline_mode<synchronous>, transform_indices = @transform_4, window_bounds = array<i64: 8, 1>}, {pipeline_mode = #tpu.pipeline_mode<synchronous>, transform_indices = @transform_5, window_bounds = array<i64: 8, 1>}, {pipeline_mode = #tpu.pipeline_mode<synchronous>, transform_indices = @transform_6, window_bounds = array<i64: 8, 1>}, {pipeline_mode = #tpu.pipeline_mode<synchronous>, transform_indices = @transform_7, window_bounds = array<i64: 8, 1>}, {pipeline_mode = #tpu.pipeline_mode<synchronous>, transform_indices = @transform_8, window_bounds = array<i64: 1, 1156>}, {transform_indices = @transform_9, window_bounds = array<i64: 1, 8, 1156>}]} {
    %c0 = arith.constant 0 : index
    %c0_0 = arith.constant 0 : index
    %c0_1 = arith.constant 0 : index
    %0 = vector.load %arg1[%c0, %c0_0, %c0_1] : memref<1x8x256xbf16, #tpu.memory_space<vmem>>, vector<1x8x256xbf16>
    %1 = vector.shape_cast %0 : vector<1x8x256xbf16> to vector<8x256xbf16>
    %c0_2 = arith.constant 0 : index
    %c0_3 = arith.constant 0 : index
    %2 = vector.load %arg2[%c0_2, %c0_3] : memref<256x1408xbf16, #tpu.memory_space<vmem>>, vector<256x1408xbf16>
    %cst = arith.constant dense<0.000000e+00> : vector<8x1408xf32>
    %3 = tpu.matmul %1, %2, %cst {dimension_numbers = #tpu.dot_dimension_numbers<[1], [0], [0], [1], [0, 0, 1, 1], [], []>} : vector<8x256xbf16>, vector<256x1408xbf16>, vector<8x1408xf32> -> vector<8x1408xf32>
    %c0_4 = arith.constant 0 : index
    %c0_5 = arith.constant 0 : index
    %4 = vector.load %arg3[%c0_4, %c0_5] : memref<8x72xbf16, #tpu.memory_space<vmem>>, vector<8x72xbf16>
    %5 = vector.extract_strided_slice %3 {offsets = [0, 93], sizes = [8, 1156], strides = [1, 1]} : vector<8x1408xf32> to vector<8x1156xf32>
    %6 = vector.extract_strided_slice %3 {offsets = [0, 94], sizes = [8, 1156], strides = [1, 1]} : vector<8x1408xf32> to vector<8x1156xf32>
    %7 = vector.extract_strided_slice %3 {offsets = [0, 95], sizes = [8, 1156], strides = [1, 1]} : vector<8x1408xf32> to vector<8x1156xf32>
    %8 = vector.extract_strided_slice %3 {offsets = [0, 127], sizes = [8, 1156], strides = [1, 1]} : vector<8x1408xf32> to vector<8x1156xf32>
    %9 = vector.extract_strided_slice %3 {offsets = [0, 128], sizes = [8, 1156], strides = [1, 1]} : vector<8x1408xf32> to vector<8x1156xf32>
    %10 = vector.extract_strided_slice %3 {offsets = [0, 129], sizes = [8, 1156], strides = [1, 1]} : vector<8x1408xf32> to vector<8x1156xf32>
    %11 = vector.extract_strided_slice %3 {offsets = [0, 161], sizes = [8, 1156], strides = [1, 1]} : vector<8x1408xf32> to vector<8x1156xf32>
    %12 = vector.extract_strided_slice %3 {offsets = [0, 162], sizes = [8, 1156], strides = [1, 1]} : vector<8x1408xf32> to vector<8x1156xf32>
    %13 = vector.extract_strided_slice %3 {offsets = [0, 163], sizes = [8, 1156], strides = [1, 1]} : vector<8x1408xf32> to vector<8x1156xf32>
    %14 = tpu.concatenate %5, %6, %7, %8, %9, %10, %11, %12, %13 in 0 : vector<8x1156xf32>, vector<8x1156xf32>, vector<8x1156xf32>, vector<8x1156xf32>, vector<8x1156xf32>, vector<8x1156xf32>, vector<8x1156xf32>, vector<8x1156xf32>, vector<8x1156xf32> -> vector<72x1156xf32>
    %15 = arith.truncf %14 : vector<72x1156xf32> to vector<72x1156xbf16>
    %cst_6 = arith.constant dense<0.000000e+00> : vector<8x1156xf32>
    %16 = tpu.matmul %4, %15, %cst_6 {dimension_numbers = #tpu.dot_dimension_numbers<[1], [0], [0], [1], [0, 0, 1, 1], [], []>} : vector<8x72xbf16>, vector<72x1156xbf16>, vector<8x1156xf32> -> vector<8x1156xf32>
    %c0_7 = arith.constant 0 : index
    %c0_8 = arith.constant 0 : index
    %17 = vector.load %arg5[%c0_7, %c0_8] : memref<8x1xf32, #tpu.memory_space<vmem>>, vector<8x1xf32>
    %18 = vector.broadcast %17 : vector<8x1xf32> to vector<8x1156xf32>
    %19 = arith.mulf %16, %18 : vector<8x1156xf32>
    %c0_9 = arith.constant 0 : index
    %c0_10 = arith.constant 0 : index
    %20 = vector.load %arg6[%c0_9, %c0_10] : memref<8x1xf32, #tpu.memory_space<vmem>>, vector<8x1xf32>
    %21 = vector.broadcast %20 : vector<8x1xf32> to vector<8x1156xf32>
    %22 = arith.addf %19, %21 : vector<8x1156xf32>
    %cst_11 = arith.constant 0.000000e+00 : f32
    %23 = vector.broadcast %cst_11 : f32 to vector<8x1156xf32>
    %24 = arith.maximumf %22, %23 : vector<8x1156xf32>
    %c0_12 = arith.constant 0 : index
    %c0_13 = arith.constant 0 : index
    %25 = vector.load %arg9[%c0_12, %c0_13] : memref<1x1156xf32, #tpu.memory_space<vmem>>, vector<1x1156xf32>
    %26 = vector.broadcast %25 : vector<1x1156xf32> to vector<8x1156xf32>
    %27 = arith.mulf %24, %26 : vector<8x1156xf32>
    %cst_14 = arith.constant 0.000000e+00 : f32
    %28 = vector.broadcast %cst_14 : f32 to vector<8x128xf32>
    %c0_15 = arith.constant 0 : index
    %c0_16 = arith.constant 0 : index
    %29 = vector.load %arg11[%c0_15, %c0_16] : memref<8x1408xf32, #tpu.memory_space<vmem>>, vector<8x128xf32>
    tpu.vector_store %arg11[%c0_15, %c0_16], %28 {strides = array<i32>} : memref<8x1408xf32, #tpu.memory_space<vmem>>, vector<8x128xf32>,
    %c0_17 = arith.constant 0 : index
    %c128 = arith.constant 128 : index
    %30 = vector.load %arg11[%c0_17, %c128] : memref<8x1408xf32, #tpu.memory_space<vmem>>, vector<8x1156xf32>
    tpu.vector_store %arg11[%c0_17, %c128], %27 {strides = array<i32>} : memref<8x1408xf32, #tpu.memory_space<vmem>>, vector<8x1156xf32>,
    %cst_18 = arith.constant 0.000000e+00 : f32
    %31 = vector.broadcast %cst_18 : f32 to vector<8x124xf32>
    %c0_19 = arith.constant 0 : index
    %c1284 = arith.constant 1284 : index
    %32 = vector.load %arg11[%c0_19, %c1284] : memref<8x1408xf32, #tpu.memory_space<vmem>>, vector<8x124xf32>
    tpu.vector_store %arg11[%c0_19, %c1284], %31 {strides = array<i32>} : memref<8x1408xf32, #tpu.memory_space<vmem>>, vector<8x124xf32>,
    %c0_20 = arith.constant 0 : index
    %c0_21 = arith.constant 0 : index
    %33 = vector.load %arg4[%c0_20, %c0_21] : memref<8x72xbf16, #tpu.memory_space<vmem>>, vector<8x72xbf16>
    %c0_22 = arith.constant 0 : index
    %c93 = arith.constant 93 : index
    %34 = vector.load %arg11[%c0_22, %c93] : memref<8x1408xf32, #tpu.memory_space<vmem>>, vector<8x1156xf32>
    %c0_23 = arith.constant 0 : index
    %c94 = arith.constant 94 : index
    %35 = vector.load %arg11[%c0_23, %c94] : memref<8x1408xf32, #tpu.memory_space<vmem>>, vector<8x1156xf32>
    %c0_24 = arith.constant 0 : index
    %c95 = arith.constant 95 : index
    %36 = vector.load %arg11[%c0_24, %c95] : memref<8x1408xf32, #tpu.memory_space<vmem>>, vector<8x1156xf32>
    %c0_25 = arith.constant 0 : index
    %c127 = arith.constant 127 : index
    %37 = vector.load %arg11[%c0_25, %c127] : memref<8x1408xf32, #tpu.memory_space<vmem>>, vector<8x1156xf32>
    %c0_26 = arith.constant 0 : index
    %c128_27 = arith.constant 128 : index
    %38 = vector.load %arg11[%c0_26, %c128_27] : memref<8x1408xf32, #tpu.memory_space<vmem>>, vector<8x1156xf32>
    %c0_28 = arith.constant 0 : index
    %c129 = arith.constant 129 : index
    %39 = vector.load %arg11[%c0_28, %c129] : memref<8x1408xf32, #tpu.memory_space<vmem>>, vector<8x1156xf32>
    %c0_29 = arith.constant 0 : index
    %c161 = arith.constant 161 : index
    %40 = vector.load %arg11[%c0_29, %c161] : memref<8x1408xf32, #tpu.memory_space<vmem>>, vector<8x1156xf32>
    %c0_30 = arith.constant 0 : index
    %c162 = arith.constant 162 : index
    %41 = vector.load %arg11[%c0_30, %c162] : memref<8x1408xf32, #tpu.memory_space<vmem>>, vector<8x1156xf32>
    %c0_31 = arith.constant 0 : index
    %c163 = arith.constant 163 : index
    %42 = vector.load %arg11[%c0_31, %c163] : memref<8x1408xf32, #tpu.memory_space<vmem>>, vector<8x1156xf32>
    %43 = tpu.concatenate %34, %35, %36, %37, %38, %39, %40, %41, %42 in 0 : vector<8x1156xf32>, vector<8x1156xf32>, vector<8x1156xf32>, vector<8x1156xf32>, vector<8x1156xf32>, vector<8x1156xf32>, vector<8x1156xf32>, vector<8x1156xf32>, vector<8x1156xf32> -> vector<72x1156xf32>
    %44 = arith.truncf %43 : vector<72x1156xf32> to vector<72x1156xbf16>
    %cst_32 = arith.constant dense<0.000000e+00> : vector<8x1156xf32>
    %45 = tpu.matmul %33, %44, %cst_32 {dimension_numbers = #tpu.dot_dimension_numbers<[1], [0], [0], [1], [0, 0, 1, 1], [], []>} : vector<8x72xbf16>, vector<72x1156xbf16>, vector<8x1156xf32> -> vector<8x1156xf32>
    %c0_33 = arith.constant 0 : index
    %c0_34 = arith.constant 0 : index
    %46 = vector.load %arg7[%c0_33, %c0_34] : memref<8x1xf32, #tpu.memory_space<vmem>>, vector<8x1xf32>
    %47 = vector.broadcast %46 : vector<8x1xf32> to vector<8x1156xf32>
    %48 = arith.mulf %45, %47 : vector<8x1156xf32>
    %c0_35 = arith.constant 0 : index
    %c0_36 = arith.constant 0 : index
    %49 = vector.load %arg8[%c0_35, %c0_36] : memref<8x1xf32, #tpu.memory_space<vmem>>, vector<8x1xf32>
    %50 = vector.broadcast %49 : vector<8x1xf32> to vector<8x1156xf32>
    %51 = arith.addf %48, %50 : vector<8x1156xf32>
    %cst_37 = arith.constant 0.000000e+00 : f32
    %52 = vector.broadcast %cst_37 : f32 to vector<8x1156xf32>
    %53 = arith.maximumf %51, %52 : vector<8x1156xf32>
    %c0_38 = arith.constant 0 : index
    %c0_39 = arith.constant 0 : index
    %c0_40 = arith.constant 0 : index
    %54 = vector.load %arg10[%c0_38, %c0_39, %c0_40] : memref<1x8x1156xf32, #tpu.memory_space<vmem>>, vector<1x8x1156xf32>
    %55 = vector.shape_cast %54 : vector<1x8x1156xf32> to vector<8x1156xf32>
    %56 = vector.shape_cast %53 : vector<8x1156xf32> to vector<1x8x1156xf32>
    tpu.vector_store %arg10[%c0_38, %c0_39, %c0_40], %56 {strides = array<i32>} : memref<1x8x1156xf32, #tpu.memory_space<vmem>>, vector<1x8x1156xf32>,
    return
  }
  func.func @transform_0(%arg0: i32) -> (i32, i32, i32) {
    %c0_i32 = arith.constant 0 : i32
    %c0_i32_0 = arith.constant 0 : i32
    %c0_i32_1 = arith.constant 0 : i32
    return %arg0, %c0_i32, %c0_i32_0 : i32, i32, i32
  }
  func.func @transform_1(%arg0: i32) -> (i32, i32) {
    %c0_i32 = arith.constant 0 : i32
    %c0_i32_0 = arith.constant 0 : i32
    %c0_i32_1 = arith.constant 0 : i32
    return %c0_i32, %c0_i32_0 : i32, i32
  }
  func.func @transform_2(%arg0: i32) -> (i32, i32) {
    %c0_i32 = arith.constant 0 : i32
    %c0_i32_0 = arith.constant 0 : i32
    %c0_i32_1 = arith.constant 0 : i32
    return %c0_i32, %c0_i32_0 : i32, i32
  }
  func.func @transform_3(%arg0: i32) -> (i32, i32) {
    %c0_i32 = arith.constant 0 : i32
    %c0_i32_0 = arith.constant 0 : i32
    %c0_i32_1 = arith.constant 0 : i32
    return %c0_i32, %c0_i32_0 : i32, i32
  }
  func.func @transform_4(%arg0: i32) -> (i32, i32) {
    %c0_i32 = arith.constant 0 : i32
    %c0_i32_0 = arith.constant 0 : i32
    %c0_i32_1 = arith.constant 0 : i32
    return %c0_i32, %c0_i32_0 : i32, i32
  }
  func.func @transform_5(%arg0: i32) -> (i32, i32) {
    %c0_i32 = arith.constant 0 : i32
    %c0_i32_0 = arith.constant 0 : i32
    %c0_i32_1 = arith.constant 0 : i32
    return %c0_i32, %c0_i32_0 : i32, i32
  }
  func.func @transform_6(%arg0: i32) -> (i32, i32) {
    %c0_i32 = arith.constant 0 : i32
    %c0_i32_0 = arith.constant 0 : i32
    %c0_i32_1 = arith.constant 0 : i32
    return %c0_i32, %c0_i32_0 : i32, i32
  }
  func.func @transform_7(%arg0: i32) -> (i32, i32) {
    %c0_i32 = arith.constant 0 : i32
    %c0_i32_0 = arith.constant 0 : i32
    %c0_i32_1 = arith.constant 0 : i32
    return %c0_i32, %c0_i32_0 : i32, i32
  }
  func.func @transform_8(%arg0: i32) -> (i32, i32) {
    %c0_i32 = arith.constant 0 : i32
    %c0_i32_0 = arith.constant 0 : i32
    %c0_i32_1 = arith.constant 0 : i32
    return %c0_i32, %c0_i32_0 : i32, i32
  }
  func.func @transform_9(%arg0: i32) -> (i32, i32, i32) {
    %c0_i32 = arith.constant 0 : i32
    %c0_i32_0 = arith.constant 0 : i32
    %c0_i32_1 = arith.constant 0 : i32
    return %arg0, %c0_i32, %c0_i32_0 : i32, i32, i32
  }
}

</mosaic_0001>

<llo_original>
// kernel: decoder_block_forward.1
$region0: #{decoder_block_forward.1}
  #allocation0 [shape = 'u32[]', space=smem, size = 0x4, offset = 0x4, fixed_abs, tag = 'smem constant byte address 0x4 - core index']
  #allocation1 [shape = 'u32[72,128]{1,0:T(1,128)}', space=vmem, size = 0x9000, scoped, tag = 'internal scratch']
  #allocation2 [shape = 'f32[8,1408]{1,0:T(8,128)}', space=vmem, size = 0xb000, scoped, tag = 'scratch operand']
  %s0 = inlined_call_operand.vmem [shape: bf16[2,8,256], index: 0, kind: input, shape index: {}]
  %s1 = inlined_call_operand.vmem [shape: bf16[256,1408], index: 1, kind: input, shape index: {}]
  %s2 = inlined_call_operand.vmem [shape: bf16[8,72], index: 2, kind: input, shape index: {}]
  %s3 = inlined_call_operand.vmem [shape: bf16[8,72], index: 3, kind: input, shape index: {}]
  %s4 = inlined_call_operand.vmem [shape: f32[8,1], index: 4, kind: input, shape index: {}]
  %s5 = inlined_call_operand.vmem [shape: f32[8,1], index: 5, kind: input, shape index: {}]
  %s6 = inlined_call_operand.vmem [shape: f32[8,1], index: 6, kind: input, shape index: {}]
  %s7 = inlined_call_operand.vmem [shape: f32[8,1], index: 7, kind: input, shape index: {}]
  %s8 = inlined_call_operand.vmem [shape: f32[1,1156], index: 8, kind: input, shape index: {}]
  %s9 = inlined_call_operand.vmem [shape: f32[2,8,1156], index: 9, kind: output, shape index: {}]
  %s10 = sld [smem:[#allocation0]]
  $region69: #{decoder_block_forward.1} parent=0
    _
  %s12 = ssub.s32 1, %s10
  %s13 = scalar_select 0, %s12, %s10
  loop: start=0, step=1, limit=4
  $region2: #{decoder_block_forward.1} parent=0 // loop_pre_header
    _
  $region3: #{decoder_block_forward.1} parent=0 // loop_header
    %s15 = sphi 0, %s19
    %p16 = scmp.ge.s32.totalorder %s15, 4
    %s25 = sphi 0, %s27
    %s28 = sphi 0, %s25
    %s29 = sphi 0, %s28
    %s45 = sphi 0, %s29
    %s49 = sphi 0, %s49
    %s51 = sphi 0, %s49
    %s52 = sphi 0, %s51
    %s66 = sphi 0, %s52
    %s70 = sphi 0, %s70
    %s72 = sphi 0, %s70
    %s73 = sphi 0, %s72
    %s87 = sphi 0, %s73
    %s91 = sphi 0, %s91
    %s93 = sphi 0, %s91
    %s94 = sphi 0, %s93
    %s108 = sphi 0, %s94
    %s112 = sphi 0, %s112
    %s114 = sphi 0, %s112
    %s115 = sphi 0, %s114
    %s129 = sphi 0, %s115
    %s133 = sphi 0, %s133
    %s135 = sphi 0, %s133
    %s136 = sphi 0, %s135
    %s150 = sphi 0, %s136
    %s154 = sphi 0, %s154
    %s156 = sphi 0, %s154
    %s157 = sphi 0, %s156
    %s171 = sphi 0, %s157
    %s175 = sphi 0, %s175
    %s177 = sphi 0, %s175
    %s178 = sphi 0, %s177
    %s192 = sphi 0, %s178
    %s196 = sphi 0, %s196
    %s198 = sphi 0, %s196
    %s199 = sphi 0, %s198
    %s213 = sphi 0, %s199
    %s219 = sphi 0, %s221
    %s222 = sphi 0, %s219
    %s223 = sphi 0, %s222
    %s239 = sphi 0, %s223
  $region4: #{decoder_block_forward.1} parent=0 // loop_header_branch
    %18 = sbr.rel (%p16) target = $region8
  $region5: #{decoder_block_forward.1} parent=0 // loop_body
    %s20 = ssub.s32 %s15, 1
    %s21 = ssub.s32 %s15, 2
    %s22 = sadd.s32 %s15, 1
    %s23 = ssub.s32 %s15, %s22
    %p24 = scmp.eq.s32.totalorder %s23, 0
    %s26 = sadd.s32 %s25, 1
    %s27 = scalar_select %p24, %s25, %s26
    %p30 = pneg %p24
    %p31 = scmp.eq.s32.totalorder %s15, 1
    %p32 = por %p30, %p31
    %p33 = scmp.ne.s32.totalorder %s25, %s28
    %p34 = scmp.eq.s32.totalorder %s15, 0
    %p35 = por %p33, %p34
    %p36 = scmp.ne.s32.totalorder %s25, %s28
    %p37 = scmp.eq.s32.totalorder %s20, 1
    %p38 = por %p36, %p37
    %p39 = scmp.ne.s32.totalorder %s28, %s29
    %p40 = scmp.eq.s32.totalorder %s20, 0
    %p41 = por %p39, %p40
    %p42 = scmp.ne.s32.totalorder %s28, %s29
    %p43 = scmp.eq.s32.totalorder %s21, 1
    %p44 = por %p42, %p43
    %p46 = scmp.ne.s32.totalorder %s29, %s45
    %p47 = scmp.eq.s32.totalorder %s21, 0
    %p48 = por %p46, %p47
    %s50 = sadd.s32 %s49, 1
    %p53 = scmp.eq.s32.totalorder %s15, 1
    %p54 = scmp.ne.s32.totalorder %s49, %s51
    %p55 = scmp.eq.s32.totalorder %s15, 0
    %p56 = por %p54, %p55
    %p57 = scmp.ne.s32.totalorder %s49, %s51
    %p58 = scmp.eq.s32.totalorder %s20, 1
    %p59 = por %p57, %p58
    %p60 = scmp.ne.s32.totalorder %s51, %s52
    %p61 = scmp.eq.s32.totalorder %s20, 0
    %p62 = por %p60, %p61
    %p63 = scmp.ne.s32.totalorder %s51, %s52
    %p64 = scmp.eq.s32.totalorder %s21, 1
    %p65 = por %p63, %p64
    %p67 = scmp.ne.s32.totalorder %s52, %s66
    %p68 = scmp.eq.s32.totalorder %s21, 0
    %p69 = por %p67, %p68
    %s71 = sadd.s32 %s70, 1
    %p74 = scmp.eq.s32.totalorder %s15, 1
    %p75 = scmp.ne.s32.totalorder %s70, %s72
    %p76 = scmp.eq.s32.totalorder %s15, 0
    %p77 = por %p75, %p76
    %p78 = scmp.ne.s32.totalorder %s70, %s72
    %p79 = scmp.eq.s32.totalorder %s20, 1
    %p80 = por %p78, %p79
    %p81 = scmp.ne.s32.totalorder %s72, %s73
    %p82 = scmp.eq.s32.totalorder %s20, 0
    %p83 = por %p81, %p82
    %p84 = scmp.ne.s32.totalorder %s72, %s73
    %p85 = scmp.eq.s32.totalorder %s21, 1
    %p86 = por %p84, %p85
    %p88 = scmp.ne.s32.totalorder %s73, %s87
    %p89 = scmp.eq.s32.totalorder %s21, 0
    %p90 = por %p88, %p89
    %s92 = sadd.s32 %s91, 1
    %p95 = scmp.eq.s32.totalorder %s15, 1
    %p96 = scmp.ne.s32.totalorder %s91, %s93
    %p97 = scmp.eq.s32.totalorder %s15, 0
    %p98 = por %p96, %p97
    %p99 = scmp.ne.s32.totalorder %s91, %s93
    %p100 = scmp.eq.s32.totalorder %s20, 1
    %p101 = por %p99, %p100
    %p102 = scmp.ne.s32.totalorder %s93, %s94
    %p103 = scmp.eq.s32.totalorder %s20, 0
    %p104 = por %p102, %p103
    %p105 = scmp.ne.s32.totalorder %s93, %s94
    %p106 = scmp.eq.s32.totalorder %s21, 1
    %p107 = por %p105, %p106
    %p109 = scmp.ne.s32.totalorder %s94, %s108
    %p110 = scmp.eq.s32.totalorder %s21, 0
    %p111 = por %p109, %p110
    %s113 = sadd.s32 %s112, 1
    %p116 = scmp.eq.s32.totalorder %s15, 1
    %p117 = scmp.ne.s32.totalorder %s112, %s114
    %p118 = scmp.eq.s32.totalorder %s15, 0
    %p119 = por %p117, %p118
    %p120 = scmp.ne.s32.totalorder %s112, %s114
    %p121 = scmp.eq.s32.totalorder %s20, 1
    %p122 = por %p120, %p121
    %p123 = scmp.ne.s32.totalorder %s114, %s115
    %p124 = scmp.eq.s32.totalorder %s20, 0
    %p125 = por %p123, %p124
    %p126 = scmp.ne.s32.totalorder %s114, %s115
    %p127 = scmp.eq.s32.totalorder %s21, 1
    %p128 = por %p126, %p127
    %p130 = scmp.ne.s32.totalorder %s115, %s129
    %p131 = scmp.eq.s32.totalorder %s21, 0
    %p132 = por %p130, %p131
    %s134 = sadd.s32 %s133, 1
    %p137 = scmp.eq.s32.totalorder %s15, 1
    %p138 = scmp.ne.s32.totalorder %s133, %s135
    %p139 = scmp.eq.s32.totalorder %s15, 0
    %p140 = por %p138, %p139
    %p141 = scmp.ne.s32.totalorder %s133, %s135
    %p142 = scmp.eq.s32.totalorder %s20, 1
    %p143 = por %p141, %p142
    %p144 = scmp.ne.s32.totalorder %s135, %s136
    %p145 = scmp.eq.s32.totalorder %s20, 0
    %p146 = por %p144, %p145
    %p147 = scmp.ne.s32.totalorder %s135, %s136
    %p148 = scmp.eq.s32.totalorder %s21, 1
    %p149 = por %p147, %p148
    %p151 = scmp.ne.s32.totalorder %s136, %s150
    %p152 = scmp.eq.s32.totalorder %s21, 0
    %p153 = por %p151, %p152
    %s155 = sadd.s32 %s154, 1
    %p158 = scmp.eq.s32.totalorder %s15, 1
    %p159 = scmp.ne.s32.totalorder %s154, %s156
    %p160 = scmp.eq.s32.totalorder %s15, 0
    %p161 = por %p159, %p160
    %p162 = scmp.ne.s32.totalorder %s154, %s156
    %p163 = scmp.eq.s32.totalorder %s20, 1
    %p164 = por %p162, %p163
    %p165 = scmp.ne.s32.totalorder %s156, %s157
    %p166 = scmp.eq.s32.totalorder %s20, 0
    %p167 = por %p165, %p166
    %p168 = scmp.ne.s32.totalorder %s156, %s157
    %p169 = scmp.eq.s32.totalorder %s21, 1
    %p170 = por %p168, %p169
    %p172 = scmp.ne.s32.totalorder %s157, %s171
    %p173 = scmp.eq.s32.totalorder %s21, 0
    %p174 = por %p172, %p173
    %s176 = sadd.s32 %s175, 1
    %p179 = scmp.eq.s32.totalorder %s15, 1
    %p180 = scmp.ne.s32.totalorder %s175, %s177
    %p181 = scmp.eq.s32.totalorder %s15, 0
    %p182 = por %p180, %p181
    %p183 = scmp.ne.s32.totalorder %s175, %s177
    %p184 = scmp.eq.s32.totalorder %s20, 1
    %p185 = por %p183, %p184
    %p186 = scmp.ne.s32.totalorder %s177, %s178
    %p187 = scmp.eq.s32.totalorder %s20, 0
    %p188 = por %p186, %p187
    %p189 = scmp.ne.s32.totalorder %s177, %s178
    %p190 = scmp.eq.s32.totalorder %s21, 1
    %p191 = por %p189, %p190
    %p193 = scmp.ne.s32.totalorder %s178, %s192
    %p194 = scmp.eq.s32.totalorder %s21, 0
    %p195 = por %p193, %p194
    %s197 = sadd.s32 %s196, 1
    %p200 = scmp.eq.s32.totalorder %s15, 1
    %p201 = scmp.ne.s32.totalorder %s196, %s198
    %p202 = scmp.eq.s32.totalorder %s15, 0
    %p203 = por %p201, %p202
    %p204 = scmp.ne.s32.totalorder %s196, %s198
    %p205 = scmp.eq.s32.totalorder %s20, 1
    %p206 = por %p204, %p205
    %p207 = scmp.ne.s32.totalorder %s198, %s199
    %p208 = scmp.eq.s32.totalorder %s20, 0
    %p209 = por %p207, %p208
    %p210 = scmp.ne.s32.totalorder %s198, %s199
    %p211 = scmp.eq.s32.totalorder %s21, 1
    %p212 = por %p210, %p211
    %p214 = scmp.ne.s32.totalorder %s199, %s213
    %p215 = scmp.eq.s32.totalorder %s21, 0
    %p216 = por %p214, %p215
    %s217 = ssub.s32 %s15, %s22
    %p218 = scmp.eq.s32.totalorder %s217, 0
    %s220 = sadd.s32 %s219, 1
    %s221 = scalar_select %p218, %s219, %s220
    %p224 = pneg %p218
    %p225 = scmp.eq.s32.totalorder %s15, 1
    %p226 = por %p224, %p225
    %p227 = scmp.ne.s32.totalorder %s219, %s222
    %p228 = scmp.eq.s32.totalorder %s15, 0
    %p229 = por %p227, %p228
    %p230 = scmp.ne.s32.totalorder %s219, %s222
    %p231 = scmp.eq.s32.totalorder %s20, 1
    %p232 = por %p230, %p231
    %p233 = scmp.ne.s32.totalorder %s222, %s223
    %p234 = scmp.eq.s32.totalorder %s20, 0
    %p235 = por %p233, %p234
    %p236 = scmp.ne.s32.totalorder %s222, %s223
    %p237 = scmp.eq.s32.totalorder %s21, 1
    %p238 = por %p236, %p237
    %p240 = scmp.ne.s32.totalorder %s223, %s239
    %p241 = scmp.eq.s32.totalorder %s21, 0
    %p242 = por %p240, %p241
    %p243 = scmp.le.s32.totalorder 1, %s15
    %p244 = scmp.lt.s32.totalorder %s15, 3
    %p245 = pnand %p243, %p244
    %p246 = pneg %p245
    // Predicated region
    $region9: #{decoder_block_forward.1} parent=5 // pred_check
      _
    $region10: #{decoder_block_forward.1} parent=5 // pred_check_branch
      %248 = sbr.rel (%p245) target = $region12
    $region11: #{decoder_block_forward.1} parent=5 // pred_region
      %s249 = ssub.s32 %s15, 1
      // Predicated region
      $region13: #{decoder_block_forward.1} parent=11 // pred_check
        %p250 = pneg %p62
      $region14: #{decoder_block_forward.1} parent=11 // pred_check_branch
        %252 = sbr.rel (%p250) target = $region16
      $region15: #{decoder_block_forward.1} parent=11 // pred_region
        _
      $region16: #{decoder_block_forward.1} parent=11 // pred_fallthru
        _
      // Predicated region
      $region17: #{decoder_block_forward.1} parent=11 // pred_check
        %p253 = pneg %p83
      $region18: #{decoder_block_forward.1} parent=11 // pred_check_branch
        %255 = sbr.rel (%p253) target = $region20
      $region19: #{decoder_block_forward.1} parent=11 // pred_region
        _
      $region20: #{decoder_block_forward.1} parent=11 // pred_fallthru
        _
      // Predicated region
      $region21: #{decoder_block_forward.1} parent=11 // pred_check
        %p256 = pneg %p104
      $region22: #{decoder_block_forward.1} parent=11 // pred_check_branch
        %258 = sbr.rel (%p256) target = $region24
      $region23: #{decoder_block_forward.1} parent=11 // pred_region
        _
      $region24: #{decoder_block_forward.1} parent=11 // pred_fallthru
        _
      // Predicated region
      $region25: #{decoder_block_forward.1} parent=11 // pred_check
        %p259 = pneg %p125
      $region26: #{decoder_block_forward.1} parent=11 // pred_check_branch
        %261 = sbr.rel (%p259) target = $region28
      $region27: #{decoder_block_forward.1} parent=11 // pred_region
        _
      $region28: #{decoder_block_forward.1} parent=11 // pred_fallthru
        _
      // Predicated region
      $region29: #{decoder_block_forward.1} parent=11 // pred_check
        %p262 = pneg %p146
      $region30: #{decoder_block_forward.1} parent=11 // pred_check_branch
        %264 = sbr.rel (%p262) target = $region32
      $region31: #{decoder_block_forward.1} parent=11 // pred_region
        _
      $region32: #{decoder_block_forward.1} parent=11 // pred_fallthru
        _
      // Predicated region
      $region33: #{decoder_block_forward.1} parent=11 // pred_check
        %p265 = pneg %p167
      $region34: #{decoder_block_forward.1} parent=11 // pred_check_branch
        %267 = sbr.rel (%p265) target = $region36
      $region35: #{decoder_block_forward.1} parent=11 // pred_region
        _
      $region36: #{decoder_block_forward.1} parent=11 // pred_fallthru
        _
      // Predicated region
      $region37: #{decoder_block_forward.1} parent=11 // pred_check
        %p268 = pneg %p188
      $region38: #{decoder_block_forward.1} parent=11 // pred_check_branch
        %270 = sbr.rel (%p268) target = $region40
      $region39: #{decoder_block_forward.1} parent=11 // pred_region
        _
      $region40: #{decoder_block_forward.1} parent=11 // pred_fallthru
        _
      // Predicated region
      $region41: #{decoder_block_forward.1} parent=11 // pred_check
        %p271 = pneg %p209
      $region42: #{decoder_block_forward.1} parent=11 // pred_check_branch
        %273 = sbr.rel (%p271) target = $region44
      $region43: #{decoder_block_forward.1} parent=11 // pred_region
        _
      $region44: #{decoder_block_forward.1} parent=11 // pred_fallthru
        _
    $region12: #{decoder_block_forward.1} parent=5 // pred_fallthru
      _
    %p274 = scmp.lt.s32.totalorder %s15, 2
    // Predicated region
    $region45: #{decoder_block_forward.1} parent=5 // pred_check
      %p275 = pneg %p274
    $region46: #{decoder_block_forward.1} parent=5 // pred_check_branch
      %277 = sbr.rel (%p275) target = $region48
    $region47: #{decoder_block_forward.1} parent=5 // pred_region
      // Predicated region
      $region49: #{decoder_block_forward.1} parent=47 // pred_check
        %p278 = pneg %p35
      $region50: #{decoder_block_forward.1} parent=47 // pred_check_branch
        %280 = sbr.rel (%p278) target = $region52
      $region51: #{decoder_block_forward.1} parent=47 // pred_region
        %p281 = scmp.lt.s32.totalorder %s15, 1
        %s282 = scalar_select %p281, %s15, 1
        %s283 = smul.addr %s282, 2
        %s284 = smul.addr %s283, 4
        %s285 = scalar_lea.vmem %s0, %s284
      $region52: #{decoder_block_forward.1} parent=47 // pred_fallthru
        _
    $region48: #{decoder_block_forward.1} parent=5 // pred_fallthru
      _
    %p286 = scmp.le.s32.totalorder 1, %s15
    %p287 = scmp.lt.s32.totalorder %s15, 3
    %p288 = pnand %p286, %p287
    %p289 = pneg %p288
    // Predicated region
    $region53: #{decoder_block_forward.1} parent=5 // pred_check
      _
    $region54: #{decoder_block_forward.1} parent=5 // pred_check_branch
      %291 = sbr.rel (%p288) target = $region56
    $region55: #{decoder_block_forward.1} parent=5 // pred_region
      %s292 = ssub.s32 %s15, 1
      %p293 = scmp.lt.s32.totalorder %s20, 1
      %s294 = scalar_select %p293, %s20, 1
      %s295 = smul.addr %s294, 2
      %s296 = smul.addr %s295, 4
      %s297 = scalar_lea.vmem %s0, %s296
      %p298 = pneg %p41
      %p299 = pneg %p38
      %p300 = pneg %p62
      %p301 = pneg %p59
      %p302 = pneg %p83
      %p303 = pneg %p80
      %p304 = pneg %p104
      %p305 = pneg %p101
      %p306 = pneg %p125
      %p307 = pneg %p122
      %p308 = pneg %p146
      %p309 = pneg %p143
      %p310 = pneg %p167
      %p311 = pneg %p164
      %p312 = pneg %p188
      %p313 = pneg %p185
      %p314 = pneg %p209
      %p315 = pneg %p206
      %p316 = pneg %p235
      %p317 = pneg %p232
      %p318 = scmp.lt.s32.totalorder %s20, 1
      %s319 = scalar_select %p318, %s20, 1
      %s320 = smul.addr %s319, 10
      %s321 = smul.addr %s320, 8
      %s322 = scalar_lea.vmem %s9, %s321
      %p323 = scmp.lt.s32.totalorder %s20, 1
      %s324 = scalar_select %p323, %s20, 1
      %s325 = smul.addr %s324, 2
      %s326 = smul.addr %s325, 4
      %s327 = scalar_lea.vmem %s0, %s326
      %p328 = scmp.lt.s32.totalorder %s20, 1
      %s329 = scalar_select %p328, %s20, 1
      %s330 = smul.addr %s329, 10
      %s331 = smul.addr %s330, 8
      %s332 = scalar_lea.vmem %s9, %s331
      %v334 = vld [vmem:[%s327] sm:$0xff]
      %v335 = vld [vmem:[%s1] sm:$0xff]
      %v336 = vld [vmem:[%s1 + $0x8] sm:$0xff]
      %v337 = vld [vmem:[%s1 + $0x10] sm:$0xff]
      %v338 = vld [vmem:[%s1 + $0x18] sm:$0xff]
      %v339 = vld [vmem:[%s1 + $0x20] sm:$0xff]
      %v340 = vld [vmem:[%s1 + $0x28] sm:$0xf]
      %v341 = vld [vmem:[%s1 + $0x2c] sm:$0xff]
      %v342 = vld [vmem:[%s1 + $0x34] sm:$0xff]
      %v343 = vld [vmem:[%s1 + $0x3c] sm:$0xff]
      %v344 = vld [vmem:[%s1 + $0x44] sm:$0xff]
      %v345 = vld [vmem:[%s1 + $0x4c] sm:$0xff]
      %v346 = vld [vmem:[%s1 + $0x54] sm:$0xf]
      %v347 = vld [vmem:[%s1 + $0x58] sm:$0xff]
      %v348 = vld [vmem:[%s1 + $0x60] sm:$0xff]
      %v349 = vld [vmem:[%s1 + $0x68] sm:$0xff]
      %v350 = vld [vmem:[%s1 + $0x70] sm:$0xff]
      %v351 = vld [vmem:[%s1 + $0x78] sm:$0xff]
      %v352 = vld [vmem:[%s1 + $0x80] sm:$0xf]
      %v353 = vld [vmem:[%s1 + $0x84] sm:$0xff]
      %v354 = vld [vmem:[%s1 + $0x8c] sm:$0xff]
      %v355 = vld [vmem:[%s1 + $0x94] sm:$0xff]
      %v356 = vld [vmem:[%s1 + $0x9c] sm:$0xff]
      %v357 = vld [vmem:[%s1 + $0xa4] sm:$0xff]
      %v358 = vld [vmem:[%s1 + $0xac] sm:$0xf]
      %v359 = vld [vmem:[%s1 + $0xb0] sm:$0xff]
      %v360 = vld [vmem:[%s1 + $0xb8] sm:$0xff]
      %v361 = vld [vmem:[%s1 + $0xc0] sm:$0xff]
      %v362 = vld [vmem:[%s1 + $0xc8] sm:$0xff]
      %v363 = vld [vmem:[%s1 + $0xd0] sm:$0xff]
      %v364 = vld [vmem:[%s1 + $0xd8] sm:$0xf]
      %v365 = vld [vmem:[%s1 + $0xdc] sm:$0xff]
      %v366 = vld [vmem:[%s1 + $0xe4] sm:$0xff]
      %v367 = vld [vmem:[%s1 + $0xec] sm:$0xff]
      %v368 = vld [vmem:[%s1 + $0xf4] sm:$0xff]
      %v369 = vld [vmem:[%s1 + $0xfc] sm:$0xff]
      %v370 = vld [vmem:[%s1 + $0x104] sm:$0xf]
      %v371 = vld [vmem:[%s1 + $0x108] sm:$0xff]
      %v372 = vld [vmem:[%s1 + $0x110] sm:$0xff]
      %v373 = vld [vmem:[%s1 + $0x118] sm:$0xff]
      %v374 = vld [vmem:[%s1 + $0x120] sm:$0xff]
      %v375 = vld [vmem:[%s1 + $0x128] sm:$0xff]
      %v376 = vld [vmem:[%s1 + $0x130] sm:$0xf]
      %v377 = vld [vmem:[%s1 + $0x134] sm:$0xff]
      %v378 = vld [vmem:[%s1 + $0x13c] sm:$0xff]
      %v379 = vld [vmem:[%s1 + $0x144] sm:$0xff]
      %v380 = vld [vmem:[%s1 + $0x14c] sm:$0xff]
      %v381 = vld [vmem:[%s1 + $0x154] sm:$0xff]
      %v382 = vld [vmem:[%s1 + $0x15c] sm:$0xf]
      %v383 = vld [vmem:[%s1 + $0x160] sm:$0xff]
      %v384 = vld [vmem:[%s1 + $0x168] sm:$0xff]
      %v385 = vld [vmem:[%s1 + $0x170] sm:$0xff]
      %v386 = vld [vmem:[%s1 + $0x178] sm:$0xff]
      %v387 = vld [vmem:[%s1 + $0x180] sm:$0xff]
      %v388 = vld [vmem:[%s1 + $0x188] sm:$0xf]
      %v389 = vld [vmem:[%s1 + $0x18c] sm:$0xff]
      %v390 = vld [vmem:[%s1 + $0x194] sm:$0xff]
      %v391 = vld [vmem:[%s1 + $0x19c] sm:$0xff]
      %v392 = vld [vmem:[%s1 + $0x1a4] sm:$0xff]
      %v393 = vld [vmem:[%s1 + $0x1ac] sm:$0xff]
      %v394 = vld [vmem:[%s1 + $0x1b4] sm:$0xf]
      %v395 = vld [vmem:[%s1 + $0x1b8] sm:$0xff]
      %v396 = vld [vmem:[%s1 + $0x1c0] sm:$0xff]
      %v397 = vld [vmem:[%s1 + $0x1c8] sm:$0xff]
      %v398 = vld [vmem:[%s1 + $0x1d0] sm:$0xff]
      %v399 = vld [vmem:[%s1 + $0x1d8] sm:$0xff]
      %v400 = vld [vmem:[%s1 + $0x1e0] sm:$0xf]
      %v401 = vld [vmem:[%s1 + $0x1e4] sm:$0xff]
      %v402 = vld [vmem:[%s1 + $0x1ec] sm:$0xff]
      %v403 = vld [vmem:[%s1 + $0x1f4] sm:$0xff]
      %v404 = vld [vmem:[%s1 + $0x1fc] sm:$0xff]
      %v405 = vld [vmem:[%s1 + $0x204] sm:$0xff]
      %v406 = vld [vmem:[%s1 + $0x20c] sm:$0xf]
      %v407 = vld [vmem:[%s1 + $0x210] sm:$0xff]
      %v408 = vld [vmem:[%s1 + $0x218] sm:$0xff]
      %v409 = vld [vmem:[%s1 + $0x220] sm:$0xff]
      %v410 = vld [vmem:[%s1 + $0x228] sm:$0xff]
      %v411 = vld [vmem:[%s1 + $0x230] sm:$0xff]
      %v412 = vld [vmem:[%s1 + $0x238] sm:$0xf]
      %v413 = vld [vmem:[%s1 + $0x23c] sm:$0xff]
      %v414 = vld [vmem:[%s1 + $0x244] sm:$0xff]
      %v415 = vld [vmem:[%s1 + $0x24c] sm:$0xff]
      %v416 = vld [vmem:[%s1 + $0x254] sm:$0xff]
      %v417 = vld [vmem:[%s1 + $0x25c] sm:$0xff]
      %v418 = vld [vmem:[%s1 + $0x264] sm:$0xf]
      %v419 = vld [vmem:[%s1 + $0x268] sm:$0xff]
      %v420 = vld [vmem:[%s1 + $0x270] sm:$0xff]
      %v421 = vld [vmem:[%s1 + $0x278] sm:$0xff]
      %v422 = vld [vmem:[%s1 + $0x280] sm:$0xff]
      %v423 = vld [vmem:[%s1 + $0x288] sm:$0xff]
      %v424 = vld [vmem:[%s1 + $0x290] sm:$0xf]
      %v425 = vld [vmem:[%s1 + $0x294] sm:$0xff]
      %v426 = vld [vmem:[%s1 + $0x29c] sm:$0xff]
      %v427 = vld [vmem:[%s1 + $0x2a4] sm:$0xff]
      %v428 = vld [vmem:[%s1 + $0x2ac] sm:$0xff]
      %v429 = vld [vmem:[%s1 + $0x2b4] sm:$0xff]
      %v430 = vld [vmem:[%s1 + $0x2bc] sm:$0xf]
      %v431 = vld [vmem:[%s1 + $0x2c0] sm:$0xff]
      %v432 = vld [vmem:[%s1 + $0x2c8] sm:$0xff]
      %v433 = vld [vmem:[%s1 + $0x2d0] sm:$0xff]
      %v434 = vld [vmem:[%s1 + $0x2d8] sm:$0xff]
      %v435 = vld [vmem:[%s1 + $0x2e0] sm:$0xff]
      %v436 = vld [vmem:[%s1 + $0x2e8] sm:$0xf]
      %v437 = vld [vmem:[%s1 + $0x2ec] sm:$0xff]
      %v438 = vld [vmem:[%s1 + $0x2f4] sm:$0xff]
      %v439 = vld [vmem:[%s1 + $0x2fc] sm:$0xff]
      %v440 = vld [vmem:[%s1 + $0x304] sm:$0xff]
      %v441 = vld [vmem:[%s1 + $0x30c] sm:$0xff]
      %v442 = vld [vmem:[%s1 + $0x314] sm:$0xf]
      %v443 = vld [vmem:[%s1 + $0x318] sm:$0xff]
      %v444 = vld [vmem:[%s1 + $0x320] sm:$0xff]
      %v445 = vld [vmem:[%s1 + $0x328] sm:$0xff]
      %v446 = vld [vmem:[%s1 + $0x330] sm:$0xff]
      %v447 = vld [vmem:[%s1 + $0x338] sm:$0xff]
      %v448 = vld [vmem:[%s1 + $0x340] sm:$0xf]
      %v449 = vld [vmem:[%s1 + $0x344] sm:$0xff]
      %v450 = vld [vmem:[%s1 + $0x34c] sm:$0xff]
      %v451 = vld [vmem:[%s1 + $0x354] sm:$0xff]
      %v452 = vld [vmem:[%s1 + $0x35c] sm:$0xff]
      %v453 = vld [vmem:[%s1 + $0x364] sm:$0xff]
      %v454 = vld [vmem:[%s1 + $0x36c] sm:$0xf]
      %v455 = vld [vmem:[%s1 + $0x370] sm:$0xff]
      %v456 = vld [vmem:[%s1 + $0x378] sm:$0xff]
      %v457 = vld [vmem:[%s1 + $0x380] sm:$0xff]
      %v458 = vld [vmem:[%s1 + $0x388] sm:$0xff]
      %v459 = vld [vmem:[%s1 + $0x390] sm:$0xff]
      %v460 = vld [vmem:[%s1 + $0x398] sm:$0xf]
      %v461 = vld [vmem:[%s1 + $0x39c] sm:$0xff]
      %v462 = vld [vmem:[%s1 + $0x3a4] sm:$0xff]
      %v463 = vld [vmem:[%s1 + $0x3ac] sm:$0xff]
      %v464 = vld [vmem:[%s1 + $0x3b4] sm:$0xff]
      %v465 = vld [vmem:[%s1 + $0x3bc] sm:$0xff]
      %v466 = vld [vmem:[%s1 + $0x3c4] sm:$0xf]
      %v467 = vld [vmem:[%s1 + $0x3c8] sm:$0xff]
      %v468 = vld [vmem:[%s1 + $0x3d0] sm:$0xff]
      %v469 = vld [vmem:[%s1 + $0x3d8] sm:$0xff]
      %v470 = vld [vmem:[%s1 + $0x3e0] sm:$0xff]
      %v471 = vld [vmem:[%s1 + $0x3e8] sm:$0xff]
      %v472 = vld [vmem:[%s1 + $0x3f0] sm:$0xf]
      %v473 = vld [vmem:[%s1 + $0x3f4] sm:$0xff]
      %v474 = vld [vmem:[%s1 + $0x3fc] sm:$0xff]
      %v475 = vld [vmem:[%s1 + $0x404] sm:$0xff]
      %v476 = vld [vmem:[%s1 + $0x40c] sm:$0xff]
      %v477 = vld [vmem:[%s1 + $0x414] sm:$0xff]
      %v478 = vld [vmem:[%s1 + $0x41c] sm:$0xf]
      %v479 = vld [vmem:[%s1 + $0x420] sm:$0xff]
      %v480 = vld [vmem:[%s1 + $0x428] sm:$0xff]
      %v481 = vld [vmem:[%s1 + $0x430] sm:$0xff]
      %v482 = vld [vmem:[%s1 + $0x438] sm:$0xff]
      %v483 = vld [vmem:[%s1 + $0x440] sm:$0xff]
      %v484 = vld [vmem:[%s1 + $0x448] sm:$0xf]
      %v485 = vld [vmem:[%s1 + $0x44c] sm:$0xff]
      %v486 = vld [vmem:[%s1 + $0x454] sm:$0xff]
      %v487 = vld [vmem:[%s1 + $0x45c] sm:$0xff]
      %v488 = vld [vmem:[%s1 + $0x464] sm:$0xff]
      %v489 = vld [vmem:[%s1 + $0x46c] sm:$0xff]
      %v490 = vld [vmem:[%s1 + $0x474] sm:$0xf]
      %v491 = vld [vmem:[%s1 + $0x478] sm:$0xff]
      %v492 = vld [vmem:[%s1 + $0x480] sm:$0xff]
      %v493 = vld [vmem:[%s1 + $0x488] sm:$0xff]
      %v494 = vld [vmem:[%s1 + $0x490] sm:$0xff]
      %v495 = vld [vmem:[%s1 + $0x498] sm:$0xff]
      %v496 = vld [vmem:[%s1 + $0x4a0] sm:$0xf]
      %v497 = vld [vmem:[%s1 + $0x4a4] sm:$0xff]
      %v498 = vld [vmem:[%s1 + $0x4ac] sm:$0xff]
      %v499 = vld [vmem:[%s1 + $0x4b4] sm:$0xff]
      %v500 = vld [vmem:[%s1 + $0x4bc] sm:$0xff]
      %v501 = vld [vmem:[%s1 + $0x4c4] sm:$0xff]
      %v502 = vld [vmem:[%s1 + $0x4cc] sm:$0xf]
      %v503 = vld [vmem:[%s1 + $0x4d0] sm:$0xff]
      %v504 = vld [vmem:[%s1 + $0x4d8] sm:$0xff]
      %v505 = vld [vmem:[%s1 + $0x4e0] sm:$0xff]
      %v506 = vld [vmem:[%s1 + $0x4e8] sm:$0xff]
      %v507 = vld [vmem:[%s1 + $0x4f0] sm:$0xff]
      %v508 = vld [vmem:[%s1 + $0x4f8] sm:$0xf]
      %v509 = vld [vmem:[%s1 + $0x4fc] sm:$0xff]
      %v510 = vld [vmem:[%s1 + $0x504] sm:$0xff]
      %v511 = vld [vmem:[%s1 + $0x50c] sm:$0xff]
      %v512 = vld [vmem:[%s1 + $0x514] sm:$0xff]
      %v513 = vld [vmem:[%s1 + $0x51c] sm:$0xff]
      %v514 = vld [vmem:[%s1 + $0x524] sm:$0xf]
      %v515 = vld [vmem:[%s1 + $0x528] sm:$0xff]
      %v516 = vld [vmem:[%s1 + $0x530] sm:$0xff]
      %v517 = vld [vmem:[%s1 + $0x538] sm:$0xff]
      %v518 = vld [vmem:[%s1 + $0x540] sm:$0xff]
      %v519 = vld [vmem:[%s1 + $0x548] sm:$0xff]
      %v520 = vld [vmem:[%s1 + $0x550] sm:$0xf]
      %v521 = vld [vmem:[%s1 + $0x554] sm:$0xff]
      %v522 = vld [vmem:[%s1 + $0x55c] sm:$0xff]
      %v523 = vld [vmem:[%s1 + $0x564] sm:$0xff]
      %v524 = vld [vmem:[%s1 + $0x56c] sm:$0xff]
      %v525 = vld [vmem:[%s1 + $0x574] sm:$0xff]
      %v526 = vld [vmem:[%s1 + $0x57c] sm:$0xf]
      %v528 = vunpack.c.l.b16 %v334
      %v529 = vunpack.c.h.b16 %v334
      %v530 = vpack.c.b16 %v528, %v528
      %v531 = vpack.c.b16 %v529, %v529
      %v726 = vunpack.c.l.b16 %v335
      %v727 = vunpack.c.h.b16 %v335
      %v728 = vunpack.c.l.b16 %v336
      %v729 = vunpack.c.h.b16 %v336
      %v730 = vunpack.c.l.b16 %v337
      %v731 = vunpack.c.h.b16 %v337
      %v732 = vunpack.c.l.b16 %v338
      %v733 = vunpack.c.h.b16 %v338
      %v734 = vunpack.c.l.b16 %v339
      %v735 = vunpack.c.h.b16 %v339
      %v736 = vunpack.c.l.b16 %v340
      %v737 = vunpack.c.l.b16 %v341
      %v738 = vunpack.c.h.b16 %v341
      %v739 = vunpack.c.l.b16 %v342
      %v740 = vunpack.c.h.b16 %v342
      %v741 = vunpack.c.l.b16 %v343
      %v742 = vunpack.c.h.b16 %v343
      %v743 = vunpack.c.l.b16 %v344
      %v744 = vunpack.c.h.b16 %v344
      %v745 = vunpack.c.l.b16 %v345
      %v746 = vunpack.c.h.b16 %v345
      %v747 = vunpack.c.l.b16 %v346
      %v748 = vunpack.c.l.b16 %v347
      %v749 = vunpack.c.h.b16 %v347
      %v750 = vunpack.c.l.b16 %v348
      %v751 = vunpack.c.h.b16 %v348
      %v752 = vunpack.c.l.b16 %v349
      %v753 = vunpack.c.h.b16 %v349
      %v754 = vunpack.c.l.b16 %v350
      %v755 = vunpack.c.h.b16 %v350
      %v756 = vunpack.c.l.b16 %v351
      %v757 = vunpack.c.h.b16 %v351
      %v758 = vunpack.c.l.b16 %v352
      %v759 = vunpack.c.l.b16 %v353
      %v760 = vunpack.c.h.b16 %v353
      %v761 = vunpack.c.l.b16 %v354
      %v762 = vunpack.c.h.b16 %v354
      %v763 = vunpack.c.l.b16 %v355
      %v764 = vunpack.c.h.b16 %v355
      %v765 = vunpack.c.l.b16 %v356
      %v766 = vunpack.c.h.b16 %v356
      %v767 = vunpack.c.l.b16 %v357
      %v768 = vunpack.c.h.b16 %v357
      %v769 = vunpack.c.l.b16 %v358
      %v770 = vunpack.c.l.b16 %v359
      %v771 = vunpack.c.h.b16 %v359
      %v772 = vunpack.c.l.b16 %v360
      %v773 = vunpack.c.h.b16 %v360
      %v774 = vunpack.c.l.b16 %v361
      %v775 = vunpack.c.h.b16 %v361
      %v776 = vunpack.c.l.b16 %v362
      %v777 = vunpack.c.h.b16 %v362
      %v778 = vunpack.c.l.b16 %v363
      %v779 = vunpack.c.h.b16 %v363
      %v780 = vunpack.c.l.b16 %v364
      %v781 = vunpack.c.l.b16 %v365
      %v782 = vunpack.c.h.b16 %v365
      %v783 = vunpack.c.l.b16 %v366
      %v784 = vunpack.c.h.b16 %v366
      %v785 = vunpack.c.l.b16 %v367
      %v786 = vunpack.c.h.b16 %v367
      %v787 = vunpack.c.l.b16 %v368
      %v788 = vunpack.c.h.b16 %v368
      %v789 = vunpack.c.l.b16 %v369
      %v790 = vunpack.c.h.b16 %v369
      %v791 = vunpack.c.l.b16 %v370
      %v792 = vunpack.c.l.b16 %v371
      %v793 = vunpack.c.h.b16 %v371
      %v794 = vunpack.c.l.b16 %v372
      %v795 = vunpack.c.h.b16 %v372
      %v796 = vunpack.c.l.b16 %v373
      %v797 = vunpack.c.h.b16 %v373
      %v798 = vunpack.c.l.b16 %v374
      %v799 = vunpack.c.h.b16 %v374
      %v800 = vunpack.c.l.b16 %v375
      %v801 = vunpack.c.h.b16 %v375
      %v802 = vunpack.c.l.b16 %v376
      %v803 = vunpack.c.l.b16 %v377
      %v804 = vunpack.c.h.b16 %v377
      %v805 = vunpack.c.l.b16 %v378
      %v806 = vunpack.c.h.b16 %v378
      %v807 = vunpack.c.l.b16 %v379
      %v808 = vunpack.c.h.b16 %v379
      %v809 = vunpack.c.l.b16 %v380
      %v810 = vunpack.c.h.b16 %v380
      %v811 = vunpack.c.l.b16 %v381
      %v812 = vunpack.c.h.b16 %v381
      %v813 = vunpack.c.l.b16 %v382
      %v814 = vunpack.c.l.b16 %v383
      %v815 = vunpack.c.h.b16 %v383
      %v816 = vunpack.c.l.b16 %v384
      %v817 = vunpack.c.h.b16 %v384
      %v818 = vunpack.c.l.b16 %v385
      %v819 = vunpack.c.h.b16 %v385
      %v820 = vunpack.c.l.b16 %v386
      %v821 = vunpack.c.h.b16 %v386
      %v822 = vunpack.c.l.b16 %v387
      %v823 = vunpack.c.h.b16 %v387
      %v824 = vunpack.c.l.b16 %v388
      %v825 = vunpack.c.l.b16 %v389
      %v826 = vunpack.c.h.b16 %v389
      %v827 = vunpack.c.l.b16 %v390
      %v828 = vunpack.c.h.b16 %v390
      %v829 = vunpack.c.l.b16 %v391
      %v830 = vunpack.c.h.b16 %v391
      %v831 = vunpack.c.l.b16 %v392
      %v832 = vunpack.c.h.b16 %v392
      %v833 = vunpack.c.l.b16 %v393
      %v834 = vunpack.c.h.b16 %v393
      %v835 = vunpack.c.l.b16 %v394
      %v836 = vunpack.c.l.b16 %v395
      %v837 = vunpack.c.h.b16 %v395
      %v838 = vunpack.c.l.b16 %v396
      %v839 = vunpack.c.h.b16 %v396
      %v840 = vunpack.c.l.b16 %v397
      %v841 = vunpack.c.h.b16 %v397
      %v842 = vunpack.c.l.b16 %v398
      %v843 = vunpack.c.h.b16 %v398
      %v844 = vunpack.c.l.b16 %v399
      %v845 = vunpack.c.h.b16 %v399
      %v846 = vunpack.c.l.b16 %v400
      %v847 = vunpack.c.l.b16 %v401
      %v848 = vunpack.c.h.b16 %v401
      %v849 = vunpack.c.l.b16 %v402
      %v850 = vunpack.c.h.b16 %v402
      %v851 = vunpack.c.l.b16 %v403
      %v852 = vunpack.c.h.b16 %v403
      %v853 = vunpack.c.l.b16 %v404
      %v854 = vunpack.c.h.b16 %v404
      %v855 = vunpack.c.l.b16 %v405
      %v856 = vunpack.c.h.b16 %v405
      %v857 = vunpack.c.l.b16 %v406
      %v858 = vunpack.c.l.b16 %v407
      %v859 = vunpack.c.h.b16 %v407
      %v860 = vunpack.c.l.b16 %v408
      %v861 = vunpack.c.h.b16 %v408
      %v862 = vunpack.c.l.b16 %v409
      %v863 = vunpack.c.h.b16 %v409
      %v864 = vunpack.c.l.b16 %v410
      %v865 = vunpack.c.h.b16 %v410
      %v866 = vunpack.c.l.b16 %v411
      %v867 = vunpack.c.h.b16 %v411
      %v868 = vunpack.c.l.b16 %v412
      %v869 = vunpack.c.l.b16 %v413
      %v870 = vunpack.c.h.b16 %v413
      %v871 = vunpack.c.l.b16 %v414
      %v872 = vunpack.c.h.b16 %v414
      %v873 = vunpack.c.l.b16 %v415
      %v874 = vunpack.c.h.b16 %v415
      %v875 = vunpack.c.l.b16 %v416
      %v876 = vunpack.c.h.b16 %v416
      %v877 = vunpack.c.l.b16 %v417
      %v878 = vunpack.c.h.b16 %v417
      %v879 = vunpack.c.l.b16 %v418
      %v880 = vunpack.c.l.b16 %v419
      %v881 = vunpack.c.h.b16 %v419
      %v882 = vunpack.c.l.b16 %v420
      %v883 = vunpack.c.h.b16 %v420
      %v884 = vunpack.c.l.b16 %v421
      %v885 = vunpack.c.h.b16 %v421
      %v886 = vunpack.c.l.b16 %v422
      %v887 = vunpack.c.h.b16 %v422
      %v888 = vunpack.c.l.b16 %v423
      %v889 = vunpack.c.h.b16 %v423
      %v890 = vunpack.c.l.b16 %v424
      %v891 = vunpack.c.l.b16 %v425
      %v892 = vunpack.c.h.b16 %v425
      %v893 = vunpack.c.l.b16 %v426
      %v894 = vunpack.c.h.b16 %v426
      %v895 = vunpack.c.l.b16 %v427
      %v896 = vunpack.c.h.b16 %v427
      %v897 = vunpack.c.l.b16 %v428
      %v898 = vunpack.c.h.b16 %v428
      %v899 = vunpack.c.l.b16 %v429
      %v900 = vunpack.c.h.b16 %v429
      %v901 = vunpack.c.l.b16 %v430
      %v902 = vunpack.c.l.b16 %v431
      %v903 = vunpack.c.h.b16 %v431
      %v904 = vunpack.c.l.b16 %v432
      %v905 = vunpack.c.h.b16 %v432
      %v906 = vunpack.c.l.b16 %v433
      %v907 = vunpack.c.h.b16 %v433
      %v908 = vunpack.c.l.b16 %v434
      %v909 = vunpack.c.h.b16 %v434
      %v910 = vunpack.c.l.b16 %v435
      %v911 = vunpack.c.h.b16 %v435
      %v912 = vunpack.c.l.b16 %v436
      %v913 = vunpack.c.l.b16 %v437
      %v914 = vunpack.c.h.b16 %v437
      %v915 = vunpack.c.l.b16 %v438
      %v916 = vunpack.c.h.b16 %v438
      %v917 = vunpack.c.l.b16 %v439
      %v918 = vunpack.c.h.b16 %v439
      %v919 = vunpack.c.l.b16 %v440
      %v920 = vunpack.c.h.b16 %v440
      %v921 = vunpack.c.l.b16 %v441
      %v922 = vunpack.c.h.b16 %v441
      %v923 = vunpack.c.l.b16 %v442
      %v924 = vunpack.c.l.b16 %v443
      %v925 = vunpack.c.h.b16 %v443
      %v926 = vunpack.c.l.b16 %v444
      %v927 = vunpack.c.h.b16 %v444
      %v928 = vunpack.c.l.b16 %v445
      %v929 = vunpack.c.h.b16 %v445
      %v930 = vunpack.c.l.b16 %v446
      %v931 = vunpack.c.h.b16 %v446
      %v932 = vunpack.c.l.b16 %v447
      %v933 = vunpack.c.h.b16 %v447
      %v934 = vunpack.c.l.b16 %v448
      %v935 = vunpack.c.l.b16 %v449
      %v936 = vunpack.c.h.b16 %v449
      %v937 = vunpack.c.l.b16 %v450
      %v938 = vunpack.c.h.b16 %v450
      %v939 = vunpack.c.l.b16 %v451
      %v940 = vunpack.c.h.b16 %v451
      %v941 = vunpack.c.l.b16 %v452
      %v942 = vunpack.c.h.b16 %v452
      %v943 = vunpack.c.l.b16 %v453
      %v944 = vunpack.c.h.b16 %v453
      %v945 = vunpack.c.l.b16 %v454
      %v946 = vunpack.c.l.b16 %v455
      %v947 = vunpack.c.h.b16 %v455
      %v948 = vunpack.c.l.b16 %v456
      %v949 = vunpack.c.h.b16 %v456
      %v950 = vunpack.c.l.b16 %v457
      %v951 = vunpack.c.h.b16 %v457
      %v952 = vunpack.c.l.b16 %v458
      %v953 = vunpack.c.h.b16 %v458
      %v954 = vunpack.c.l.b16 %v459
      %v955 = vunpack.c.h.b16 %v459
      %v956 = vunpack.c.l.b16 %v460
      %v957 = vunpack.c.l.b16 %v461
      %v958 = vunpack.c.h.b16 %v461
      %v959 = vunpack.c.l.b16 %v462
      %v960 = vunpack.c.h.b16 %v462
      %v961 = vunpack.c.l.b16 %v463
      %v962 = vunpack.c.h.b16 %v463
      %v963 = vunpack.c.l.b16 %v464
      %v964 = vunpack.c.h.b16 %v464
      %v965 = vunpack.c.l.b16 %v465
      %v966 = vunpack.c.h.b16 %v465
      %v967 = vunpack.c.l.b16 %v466
      %v968 = vunpack.c.l.b16 %v467
      %v969 = vunpack.c.h.b16 %v467
      %v970 = vunpack.c.l.b16 %v468
      %v971 = vunpack.c.h.b16 %v468
      %v972 = vunpack.c.l.b16 %v469
      %v973 = vunpack.c.h.b16 %v469
      %v974 = vunpack.c.l.b16 %v470
      %v975 = vunpack.c.h.b16 %v470
      %v976 = vunpack.c.l.b16 %v471
      %v977 = vunpack.c.h.b16 %v471
      %v978 = vunpack.c.l.b16 %v472
      %v979 = vunpack.c.l.b16 %v473
      %v980 = vunpack.c.h.b16 %v473
      %v981 = vunpack.c.l.b16 %v474
      %v982 = vunpack.c.h.b16 %v474
      %v983 = vunpack.c.l.b16 %v475
      %v984 = vunpack.c.h.b16 %v475
      %v985 = vunpack.c.l.b16 %v476
      %v986 = vunpack.c.h.b16 %v476
      %v987 = vunpack.c.l.b16 %v477
      %v988 = vunpack.c.h.b16 %v477
      %v989 = vunpack.c.l.b16 %v478
      %v990 = vunpack.c.l.b16 %v479
      %v991 = vunpack.c.h.b16 %v479
      %v992 = vunpack.c.l.b16 %v480
      %v993 = vunpack.c.h.b16 %v480
      %v994 = vunpack.c.l.b16 %v481
      %v995 = vunpack.c.h.b16 %v481
      %v996 = vunpack.c.l.b16 %v482
      %v997 = vunpack.c.h.b16 %v482
      %v998 = vunpack.c.l.b16 %v483
      %v999 = vunpack.c.h.b16 %v483
      %v1000 = vunpack.c.l.b16 %v484
      %v1001 = vunpack.c.l.b16 %v485
      %v1002 = vunpack.c.h.b16 %v485
      %v1003 = vunpack.c.l.b16 %v486
      %v1004 = vunpack.c.h.b16 %v486
      %v1005 = vunpack.c.l.b16 %v487
      %v1006 = vunpack.c.h.b16 %v487
      %v1007 = vunpack.c.l.b16 %v488
      %v1008 = vunpack.c.h.b16 %v488
      %v1009 = vunpack.c.l.b16 %v489
      %v1010 = vunpack.c.h.b16 %v489
      %v1011 = vunpack.c.l.b16 %v490
      %v1012 = vunpack.c.l.b16 %v491
      %v1013 = vunpack.c.h.b16 %v491
      %v1014 = vunpack.c.l.b16 %v492
      %v1015 = vunpack.c.h.b16 %v492
      %v1016 = vunpack.c.l.b16 %v493
      %v1017 = vunpack.c.h.b16 %v493
      %v1018 = vunpack.c.l.b16 %v494
      %v1019 = vunpack.c.h.b16 %v494
      %v1020 = vunpack.c.l.b16 %v495
      %v1021 = vunpack.c.h.b16 %v495
      %v1022 = vunpack.c.l.b16 %v496
      %v1023 = vunpack.c.l.b16 %v497
      %v1024 = vunpack.c.h.b16 %v497
      %v1025 = vunpack.c.l.b16 %v498
      %v1026 = vunpack.c.h.b16 %v498
      %v1027 = vunpack.c.l.b16 %v499
      %v1028 = vunpack.c.h.b16 %v499
      %v1029 = vunpack.c.l.b16 %v500
      %v1030 = vunpack.c.h.b16 %v500
      %v1031 = vunpack.c.l.b16 %v501
      %v1032 = vunpack.c.h.b16 %v501
      %v1033 = vunpack.c.l.b16 %v502
      %v1034 = vunpack.c.l.b16 %v503
      %v1035 = vunpack.c.h.b16 %v503
      %v1036 = vunpack.c.l.b16 %v504
      %v1037 = vunpack.c.h.b16 %v504
      %v1038 = vunpack.c.l.b16 %v505
      %v1039 = vunpack.c.h.b16 %v505
      %v1040 = vunpack.c.l.b16 %v506
      %v1041 = vunpack.c.h.b16 %v506
      %v1042 = vunpack.c.l.b16 %v507
      %v1043 = vunpack.c.h.b16 %v507
      %v1044 = vunpack.c.l.b16 %v508
      %v1045 = vunpack.c.l.b16 %v509
      %v1046 = vunpack.c.h.b16 %v509
      %v1047 = vunpack.c.l.b16 %v510
      %v1048 = vunpack.c.h.b16 %v510
      %v1049 = vunpack.c.l.b16 %v511
      %v1050 = vunpack.c.h.b16 %v511
      %v1051 = vunpack.c.l.b16 %v512
      %v1052 = vunpack.c.h.b16 %v512
      %v1053 = vunpack.c.l.b16 %v513
      %v1054 = vunpack.c.h.b16 %v513
      %v1055 = vunpack.c.l.b16 %v514
      %v1056 = vunpack.c.l.b16 %v515
      %v1057 = vunpack.c.h.b16 %v515
      %v1058 = vunpack.c.l.b16 %v516
      %v1059 = vunpack.c.h.b16 %v516
      %v1060 = vunpack.c.l.b16 %v517
      %v1061 = vunpack.c.h.b16 %v517
      %v1062 = vunpack.c.l.b16 %v518
      %v1063 = vunpack.c.h.b16 %v518
      %v1064 = vunpack.c.l.b16 %v519
      %v1065 = vunpack.c.h.b16 %v519
      %v1066 = vunpack.c.l.b16 %v520
      %v1067 = vunpack.c.l.b16 %v521
      %v1068 = vunpack.c.h.b16 %v521
      %v1069 = vunpack.c.l.b16 %v522
      %v1070 = vunpack.c.h.b16 %v522
      %v1071 = vunpack.c.l.b16 %v523
      %v1072 = vunpack.c.h.b16 %v523
      %v1073 = vunpack.c.l.b16 %v524
      %v1074 = vunpack.c.h.b16 %v524
      %v1075 = vunpack.c.l.b16 %v525
      %v1076 = vunpack.c.h.b16 %v525
      %v1077 = vunpack.c.l.b16 %v526
      %v1078 = vpack.c.b16 %v737, %v726
      %v1079 = vpack.c.b16 %v738, %v727
      %v1080 = vpack.c.b16 %v739, %v728
      %v1081 = vpack.c.b16 %v740, %v729
      %v1082 = vpack.c.b16 %v741, %v730
      %v1083 = vpack.c.b16 %v742, %v731
      %v1084 = vpack.c.b16 %v743, %v732
      %v1085 = vpack.c.b16 %v744, %v733
      %v1086 = vpack.c.b16 %v745, %v734
      %v1087 = vpack.c.b16 %v746, %v735
      %v1088 = vpack.c.b16 %v747, %v736
      %v1089 = vpack.c.b16 %v759, %v748
      %v1090 = vpack.c.b16 %v760, %v749
      %v1091 = vpack.c.b16 %v761, %v750
      %v1092 = vpack.c.b16 %v762, %v751
      %v1093 = vpack.c.b16 %v763, %v752
      %v1094 = vpack.c.b16 %v764, %v753
      %v1095 = vpack.c.b16 %v765, %v754
      %v1096 = vpack.c.b16 %v766, %v755
      %v1097 = vpack.c.b16 %v767, %v756
      %v1098 = vpack.c.b16 %v768, %v757
      %v1099 = vpack.c.b16 %v769, %v758
      %v1100 = vpack.c.b16 %v781, %v770
      %v1101 = vpack.c.b16 %v782, %v771
      %v1102 = vpack.c.b16 %v783, %v772
      %v1103 = vpack.c.b16 %v784, %v773
      %v1104 = vpack.c.b16 %v785, %v774
      %v1105 = vpack.c.b16 %v786, %v775
      %v1106 = vpack.c.b16 %v787, %v776
      %v1107 = vpack.c.b16 %v788, %v777
      %v1108 = vpack.c.b16 %v789, %v778
      %v1109 = vpack.c.b16 %v790, %v779
      %v1110 = vpack.c.b16 %v791, %v780
      %v1111 = vpack.c.b16 %v803, %v792
      %v1112 = vpack.c.b16 %v804, %v793
      %v1113 = vpack.c.b16 %v805, %v794
      %v1114 = vpack.c.b16 %v806, %v795
      %v1115 = vpack.c.b16 %v807, %v796
      %v1116 = vpack.c.b16 %v808, %v797
      %v1117 = vpack.c.b16 %v809, %v798
      %v1118 = vpack.c.b16 %v810, %v799
      %v1119 = vpack.c.b16 %v811, %v800
      %v1120 = vpack.c.b16 %v812, %v801
      %v1121 = vpack.c.b16 %v813, %v802
      %v1122 = vpack.c.b16 %v825, %v814
      %v1123 = vpack.c.b16 %v826, %v815
      %v1124 = vpack.c.b16 %v827, %v816
      %v1125 = vpack.c.b16 %v828, %v817
      %v1126 = vpack.c.b16 %v829, %v818
      %v1127 = vpack.c.b16 %v830, %v819
      %v1128 = vpack.c.b16 %v831, %v820
      %v1129 = vpack.c.b16 %v832, %v821
      %v1130 = vpack.c.b16 %v833, %v822
      %v1131 = vpack.c.b16 %v834, %v823
      %v1132 = vpack.c.b16 %v835, %v824
      %v1133 = vpack.c.b16 %v847, %v836
      %v1134 = vpack.c.b16 %v848, %v837
      %v1135 = vpack.c.b16 %v849, %v838
      %v1136 = vpack.c.b16 %v850, %v839
      %v1137 = vpack.c.b16 %v851, %v840
      %v1138 = vpack.c.b16 %v852, %v841
      %v1139 = vpack.c.b16 %v853, %v842
      %v1140 = vpack.c.b16 %v854, %v843
      %v1141 = vpack.c.b16 %v855, %v844
      %v1142 = vpack.c.b16 %v856, %v845
      %v1143 = vpack.c.b16 %v857, %v846
      %v1144 = vpack.c.b16 %v869, %v858
      %v1145 = vpack.c.b16 %v870, %v859
      %v1146 = vpack.c.b16 %v871, %v860
      %v1147 = vpack.c.b16 %v872, %v861
      %v1148 = vpack.c.b16 %v873, %v862
      %v1149 = vpack.c.b16 %v874, %v863
      %v1150 = vpack.c.b16 %v875, %v864
      %v1151 = vpack.c.b16 %v876, %v865
      %v1152 = vpack.c.b16 %v877, %v866
      %v1153 = vpack.c.b16 %v878, %v867
      %v1154 = vpack.c.b16 %v879, %v868
      %v1155 = vpack.c.b16 %v891, %v880
      %v1156 = vpack.c.b16 %v892, %v881
      %v1157 = vpack.c.b16 %v893, %v882
      %v1158 = vpack.c.b16 %v894, %v883
      %v1159 = vpack.c.b16 %v895, %v884
      %v1160 = vpack.c.b16 %v896, %v885
      %v1161 = vpack.c.b16 %v897, %v886
      %v1162 = vpack.c.b16 %v898, %v887
      %v1163 = vpack.c.b16 %v899, %v888
      %v1164 = vpack.c.b16 %v900, %v889
      %v1165 = vpack.c.b16 %v901, %v890
      %v1166 = vpack.c.b16 %v913, %v902
      %v1167 = vpack.c.b16 %v914, %v903
      %v1168 = vpack.c.b16 %v915, %v904
      %v1169 = vpack.c.b16 %v916, %v905
      %v1170 = vpack.c.b16 %v917, %v906
      %v1171 = vpack.c.b16 %v918, %v907
      %v1172 = vpack.c.b16 %v919, %v908
      %v1173 = vpack.c.b16 %v920, %v909
      %v1174 = vpack.c.b16 %v921, %v910
      %v1175 = vpack.c.b16 %v922, %v911
      %v1176 = vpack.c.b16 %v923, %v912
      %v1177 = vpack.c.b16 %v935, %v924
      %v1178 = vpack.c.b16 %v936, %v925
      %v1179 = vpack.c.b16 %v937, %v926
      %v1180 = vpack.c.b16 %v938, %v927
      %v1181 = vpack.c.b16 %v939, %v928
      %v1182 = vpack.c.b16 %v940, %v929
      %v1183 = vpack.c.b16 %v941, %v930
      %v1184 = vpack.c.b16 %v942, %v931
      %v1185 = vpack.c.b16 %v943, %v932
      %v1186 = vpack.c.b16 %v944, %v933
      %v1187 = vpack.c.b16 %v945, %v934
      %v1188 = vpack.c.b16 %v957, %v946
      %v1189 = vpack.c.b16 %v958, %v947
      %v1190 = vpack.c.b16 %v959, %v948
      %v1191 = vpack.c.b16 %v960, %v949
      %v1192 = vpack.c.b16 %v961, %v950
      %v1193 = vpack.c.b16 %v962, %v951
      %v1194 = vpack.c.b16 %v963, %v952
      %v1195 = vpack.c.b16 %v964, %v953
      %v1196 = vpack.c.b16 %v965, %v954
      %v1197 = vpack.c.b16 %v966, %v955
      %v1198 = vpack.c.b16 %v967, %v956
      %v1199 = vpack.c.b16 %v979, %v968
      %v1200 = vpack.c.b16 %v980, %v969
      %v1201 = vpack.c.b16 %v981, %v970
      %v1202 = vpack.c.b16 %v982, %v971
      %v1203 = vpack.c.b16 %v983, %v972
      %v1204 = vpack.c.b16 %v984, %v973
      %v1205 = vpack.c.b16 %v985, %v974
      %v1206 = vpack.c.b16 %v986, %v975
      %v1207 = vpack.c.b16 %v987, %v976
      %v1208 = vpack.c.b16 %v988, %v977
      %v1209 = vpack.c.b16 %v989, %v978
      %v1210 = vpack.c.b16 %v1001, %v990
      %v1211 = vpack.c.b16 %v1002, %v991
      %v1212 = vpack.c.b16 %v1003, %v992
      %v1213 = vpack.c.b16 %v1004, %v993
      %v1214 = vpack.c.b16 %v1005, %v994
      %v1215 = vpack.c.b16 %v1006, %v995
      %v1216 = vpack.c.b16 %v1007, %v996
      %v1217 = vpack.c.b16 %v1008, %v997
      %v1218 = vpack.c.b16 %v1009, %v998
      %v1219 = vpack.c.b16 %v1010, %v999
      %v1220 = vpack.c.b16 %v1011, %v1000
      %v1221 = vpack.c.b16 %v1023, %v1012
      %v1222 = vpack.c.b16 %v1024, %v1013
      %v1223 = vpack.c.b16 %v1025, %v1014
      %v1224 = vpack.c.b16 %v1026, %v1015
      %v1225 = vpack.c.b16 %v1027, %v1016
      %v1226 = vpack.c.b16 %v1028, %v1017
      %v1227 = vpack.c.b16 %v1029, %v1018
      %v1228 = vpack.c.b16 %v1030, %v1019
      %v1229 = vpack.c.b16 %v1031, %v1020
      %v1230 = vpack.c.b16 %v1032, %v1021
      %v1231 = vpack.c.b16 %v1033, %v1022
      %v1232 = vpack.c.b16 %v1045, %v1034
      %v1233 = vpack.c.b16 %v1046, %v1035
      %v1234 = vpack.c.b16 %v1047, %v1036
      %v1235 = vpack.c.b16 %v1048, %v1037
      %v1236 = vpack.c.b16 %v1049, %v1038
      %v1237 = vpack.c.b16 %v1050, %v1039
      %v1238 = vpack.c.b16 %v1051, %v1040
      %v1239 = vpack.c.b16 %v1052, %v1041
      %v1240 = vpack.c.b16 %v1053, %v1042
      %v1241 = vpack.c.b16 %v1054, %v1043
      %v1242 = vpack.c.b16 %v1055, %v1044
      %v1243 = vpack.c.b16 %v1067, %v1056
      %v1244 = vpack.c.b16 %v1068, %v1057
      %v1245 = vpack.c.b16 %v1069, %v1058
      %v1246 = vpack.c.b16 %v1070, %v1059
      %v1247 = vpack.c.b16 %v1071, %v1060
      %v1248 = vpack.c.b16 %v1072, %v1061
      %v1249 = vpack.c.b16 %v1073, %v1062
      %v1250 = vpack.c.b16 %v1074, %v1063
      %v1251 = vpack.c.b16 %v1075, %v1064
      %v1252 = vpack.c.b16 %v1076, %v1065
      %v1253 = vpack.c.b16 %v1077, %v1066
      %1430 = vmatpush.bf16.msra.mxu0 %v1155
      %1431 = vmatpush.bf16.msra.mxu0 %v1144
      %1432 = vmatpush.bf16.msra.mxu0 %v1133
      %1433 = vmatpush.bf16.msra.mxu0 %v1122
      %1434 = vmatpush.bf16.msra.mxu0 %v1111
      %1435 = vmatpush.bf16.msra.mxu0 %v1100
      %1436 = vmatpush.bf16.msra.mxu0 %v1089
      %1437 = vmatpush.bf16.msra.mxu0 %v1078
      %1438 = vmatmul.bf16.gmra.mxu0 %v530
      %v1439 = vpop.f32.mrf.mxu0
      %v1440 = vadd.f32 0.0, %v1439
      %v1441 = vpop.f32.mrf.mxu0
      %1442 = vdwg.mxu0
      %1443 = vmatpush.bf16.msra.mxu0 %v1243
      %1444 = vmatpush.bf16.msra.mxu0 %v1232
      %1445 = vmatpush.bf16.msra.mxu0 %v1221
      %1446 = vmatpush.bf16.msra.mxu0 %v1210
      %1447 = vmatpush.bf16.msra.mxu0 %v1199
      %1448 = vmatpush.bf16.msra.mxu0 %v1188
      %1449 = vmatpush.bf16.msra.mxu0 %v1177
      %1450 = vmatpush.bf16.msra.mxu0 %v1166
      %1451 = vmatmul.bf16.gmra.mxu0 %v531
      %v1452 = vpop.f32.mrf.mxu0
      %v1453 = vadd.f32 %v1440, %v1452
      %v1454 = vpop.f32.mrf.mxu0
      %1455 = vdwg.mxu0
      %1456 = vmatpush.bf16.msra.mxu0 %v1156
      %1457 = vmatpush.bf16.msra.mxu0 %v1145
      %1458 = vmatpush.bf16.msra.mxu0 %v1134
      %1459 = vmatpush.bf16.msra.mxu0 %v1123
      %1460 = vmatpush.bf16.msra.mxu0 %v1112
      %1461 = vmatpush.bf16.msra.mxu0 %v1101
      %1462 = vmatpush.bf16.msra.mxu0 %v1090
      %1463 = vmatpush.bf16.msra.mxu0 %v1079
      %1464 = vmatmul.bf16.gmra.mxu0 %v530
      %v1465 = vpop.f32.mrf.mxu0
      %v1466 = vadd.f32 0.0, %v1465
      %v1467 = vpop.f32.mrf.mxu0
      %1468 = vdwg.mxu0
      %1469 = vmatpush.bf16.msra.mxu0 %v1244
      %1470 = vmatpush.bf16.msra.mxu0 %v1233
      %1471 = vmatpush.bf16.msra.mxu0 %v1222
      %1472 = vmatpush.bf16.msra.mxu0 %v1211
      %1473 = vmatpush.bf16.msra.mxu0 %v1200
      %1474 = vmatpush.bf16.msra.mxu0 %v1189
      %1475 = vmatpush.bf16.msra.mxu0 %v1178
      %1476 = vmatpush.bf16.msra.mxu0 %v1167
      %1477 = vmatmul.bf16.gmra.mxu0 %v531
      %v1478 = vpop.f32.mrf.mxu0
      %v1479 = vadd.f32 %v1466, %v1478
      %v1480 = vpop.f32.mrf.mxu0
      %1481 = vdwg.mxu0
      %1482 = vmatpush.bf16.msra.mxu0 %v1157
      %1483 = vmatpush.bf16.msra.mxu0 %v1146
      %1484 = vmatpush.bf16.msra.mxu0 %v1135
      %1485 = vmatpush.bf16.msra.mxu0 %v1124
      %1486 = vmatpush.bf16.msra.mxu0 %v1113
      %1487 = vmatpush.bf16.msra.mxu0 %v1102
      %1488 = vmatpush.bf16.msra.mxu0 %v1091
      %1489 = vmatpush.bf16.msra.mxu0 %v1080
      %1490 = vmatmul.bf16.gmra.mxu0 %v530
      %v1491 = vpop.f32.mrf.mxu0
      %v1492 = vadd.f32 0.0, %v1491
      %v1493 = vpop.f32.mrf.mxu0
      %1494 = vdwg.mxu0
      %1495 = vmatpush.bf16.msra.mxu0 %v1245
      %1496 = vmatpush.bf16.msra.mxu0 %v1234
      %1497 = vmatpush.bf16.msra.mxu0 %v1223
      %1498 = vmatpush.bf16.msra.mxu0 %v1212
      %1499 = vmatpush.bf16.msra.mxu0 %v1201
      %1500 = vmatpush.bf16.msra.mxu0 %v1190
      %1501 = vmatpush.bf16.msra.mxu0 %v1179
      %1502 = vmatpush.bf16.msra.mxu0 %v1168
      %1503 = vmatmul.bf16.gmra.mxu0 %v531
      %v1504 = vpop.f32.mrf.mxu0
      %v1505 = vadd.f32 %v1492, %v1504
      %v1506 = vpop.f32.mrf.mxu0
      %1507 = vdwg.mxu0
      %1508 = vmatpush.bf16.msra.mxu0 %v1158
      %1509 = vmatpush.bf16.msra.mxu0 %v1147
      %1510 = vmatpush.bf16.msra.mxu0 %v1136
      %1511 = vmatpush.bf16.msra.mxu0 %v1125
      %1512 = vmatpush.bf16.msra.mxu0 %v1114
      %1513 = vmatpush.bf16.msra.mxu0 %v1103
      %1514 = vmatpush.bf16.msra.mxu0 %v1092
      %1515 = vmatpush.bf16.msra.mxu0 %v1081
      %1516 = vmatmul.bf16.gmra.mxu0 %v530
      %v1517 = vpop.f32.mrf.mxu0
      %v1518 = vadd.f32 0.0, %v1517
      %v1519 = vpop.f32.mrf.mxu0
      %1520 = vdwg.mxu0
      %1521 = vmatpush.bf16.msra.mxu0 %v1246
      %1522 = vmatpush.bf16.msra.mxu0 %v1235
      %1523 = vmatpush.bf16.msra.mxu0 %v1224
      %1524 = vmatpush.bf16.msra.mxu0 %v1213
      %1525 = vmatpush.bf16.msra.mxu0 %v1202
      %1526 = vmatpush.bf16.msra.mxu0 %v1191
      %1527 = vmatpush.bf16.msra.mxu0 %v1180
      %1528 = vmatpush.bf16.msra.mxu0 %v1169
      %1529 = vmatmul.bf16.gmra.mxu0 %v531
      %v1530 = vpop.f32.mrf.mxu0
      %v1531 = vadd.f32 %v1518, %v1530
      %v1532 = vpop.f32.mrf.mxu0
      %1533 = vdwg.mxu0
      %1534 = vmatpush.bf16.msra.mxu0 %v1159
      %1535 = vmatpush.bf16.msra.mxu0 %v1148
      %1536 = vmatpush.bf16.msra.mxu0 %v1137
      %1537 = vmatpush.bf16.msra.mxu0 %v1126
      %1538 = vmatpush.bf16.msra.mxu0 %v1115
      %1539 = vmatpush.bf16.msra.mxu0 %v1104
      %1540 = vmatpush.bf16.msra.mxu0 %v1093
      %1541 = vmatpush.bf16.msra.mxu0 %v1082
      %1542 = vmatmul.bf16.gmra.mxu0 %v530
      %v1543 = vpop.f32.mrf.mxu0
      %v1544 = vadd.f32 0.0, %v1543
      %v1545 = vpop.f32.mrf.mxu0
      %1546 = vdwg.mxu0
      %1547 = vmatpush.bf16.msra.mxu0 %v1247
      %1548 = vmatpush.bf16.msra.mxu0 %v1236
      %1549 = vmatpush.bf16.msra.mxu0 %v1225
      %1550 = vmatpush.bf16.msra.mxu0 %v1214
      %1551 = vmatpush.bf16.msra.mxu0 %v1203
      %1552 = vmatpush.bf16.msra.mxu0 %v1192
      %1553 = vmatpush.bf16.msra.mxu0 %v1181
      %1554 = vmatpush.bf16.msra.mxu0 %v1170
      %1555 = vmatmul.bf16.gmra.mxu0 %v531
      %v1556 = vpop.f32.mrf.mxu0
      %v1557 = vadd.f32 %v1544, %v1556
      %v1558 = vpop.f32.mrf.mxu0
      %1559 = vdwg.mxu0
      %1560 = vmatpush.bf16.msra.mxu0 %v1160
      %1561 = vmatpush.bf16.msra.mxu0 %v1149
      %1562 = vmatpush.bf16.msra.mxu0 %v1138
      %1563 = vmatpush.bf16.msra.mxu0 %v1127
      %1564 = vmatpush.bf16.msra.mxu0 %v1116
      %1565 = vmatpush.bf16.msra.mxu0 %v1105
      %1566 = vmatpush.bf16.msra.mxu0 %v1094
      %1567 = vmatpush.bf16.msra.mxu0 %v1083
      %1568 = vmatmul.bf16.gmra.mxu0 %v530
      %v1569 = vpop.f32.mrf.mxu0
      %v1570 = vadd.f32 0.0, %v1569
      %v1571 = vpop.f32.mrf.mxu0
      %1572 = vdwg.mxu0
      %1573 = vmatpush.bf16.msra.mxu0 %v1248
      %1574 = vmatpush.bf16.msra.mxu0 %v1237
      %1575 = vmatpush.bf16.msra.mxu0 %v1226
      %1576 = vmatpush.bf16.msra.mxu0 %v1215
      %1577 = vmatpush.bf16.msra.mxu0 %v1204
      %1578 = vmatpush.bf16.msra.mxu0 %v1193
      %1579 = vmatpush.bf16.msra.mxu0 %v1182
      %1580 = vmatpush.bf16.msra.mxu0 %v1171
      %1581 = vmatmul.bf16.gmra.mxu0 %v531
      %v1582 = vpop.f32.mrf.mxu0
      %v1583 = vadd.f32 %v1570, %v1582
      %v1584 = vpop.f32.mrf.mxu0
      %1585 = vdwg.mxu0
      %1586 = vmatpush.bf16.msra.mxu0 %v1161
      %1587 = vmatpush.bf16.msra.mxu0 %v1150
      %1588 = vmatpush.bf16.msra.mxu0 %v1139
      %1589 = vmatpush.bf16.msra.mxu0 %v1128
      %1590 = vmatpush.bf16.msra.mxu0 %v1117
      %1591 = vmatpush.bf16.msra.mxu0 %v1106
      %1592 = vmatpush.bf16.msra.mxu0 %v1095
      %1593 = vmatpush.bf16.msra.mxu0 %v1084
      %1594 = vmatmul.bf16.gmra.mxu0 %v530
      %v1595 = vpop.f32.mrf.mxu0
      %v1596 = vadd.f32 0.0, %v1595
      %v1597 = vpop.f32.mrf.mxu0
      %1598 = vdwg.mxu0
      %1599 = vmatpush.bf16.msra.mxu0 %v1249
      %1600 = vmatpush.bf16.msra.mxu0 %v1238
      %1601 = vmatpush.bf16.msra.mxu0 %v1227
      %1602 = vmatpush.bf16.msra.mxu0 %v1216
      %1603 = vmatpush.bf16.msra.mxu0 %v1205
      %1604 = vmatpush.bf16.msra.mxu0 %v1194
      %1605 = vmatpush.bf16.msra.mxu0 %v1183
      %1606 = vmatpush.bf16.msra.mxu0 %v1172
      %1607 = vmatmul.bf16.gmra.mxu0 %v531
      %v1608 = vpop.f32.mrf.mxu0
      %v1609 = vadd.f32 %v1596, %v1608
      %v1610 = vpop.f32.mrf.mxu0
      %1611 = vdwg.mxu0
      %1612 = vmatpush.bf16.msra.mxu0 %v1162
      %1613 = vmatpush.bf16.msra.mxu0 %v1151
      %1614 = vmatpush.bf16.msra.mxu0 %v1140
      %1615 = vmatpush.bf16.msra.mxu0 %v1129
      %1616 = vmatpush.bf16.msra.mxu0 %v1118
      %1617 = vmatpush.bf16.msra.mxu0 %v1107
      %1618 = vmatpush.bf16.msra.mxu0 %v1096
      %1619 = vmatpush.bf16.msra.mxu0 %v1085
      %1620 = vmatmul.bf16.gmra.mxu0 %v530
      %v1621 = vpop.f32.mrf.mxu0
      %v1622 = vadd.f32 0.0, %v1621
      %v1623 = vpop.f32.mrf.mxu0
      %1624 = vdwg.mxu0
      %1625 = vmatpush.bf16.msra.mxu0 %v1250
      %1626 = vmatpush.bf16.msra.mxu0 %v1239
      %1627 = vmatpush.bf16.msra.mxu0 %v1228
      %1628 = vmatpush.bf16.msra.mxu0 %v1217
      %1629 = vmatpush.bf16.msra.mxu0 %v1206
      %1630 = vmatpush.bf16.msra.mxu0 %v1195
      %1631 = vmatpush.bf16.msra.mxu0 %v1184
      %1632 = vmatpush.bf16.msra.mxu0 %v1173
      %1633 = vmatmul.bf16.gmra.mxu0 %v531
      %v1634 = vpop.f32.mrf.mxu0
      %v1635 = vadd.f32 %v1622, %v1634
      %v1636 = vpop.f32.mrf.mxu0
      %1637 = vdwg.mxu0
      %1638 = vmatpush.bf16.msra.mxu0 %v1163
      %1639 = vmatpush.bf16.msra.mxu0 %v1152
      %1640 = vmatpush.bf16.msra.mxu0 %v1141
      %1641 = vmatpush.bf16.msra.mxu0 %v1130
      %1642 = vmatpush.bf16.msra.mxu0 %v1119
      %1643 = vmatpush.bf16.msra.mxu0 %v1108
      %1644 = vmatpush.bf16.msra.mxu0 %v1097
      %1645 = vmatpush.bf16.msra.mxu0 %v1086
      %1646 = vmatmul.bf16.gmra.mxu0 %v530
      %v1647 = vpop.f32.mrf.mxu0
      %v1648 = vadd.f32 0.0, %v1647
      %v1649 = vpop.f32.mrf.mxu0
      %1650 = vdwg.mxu0
      %1651 = vmatpush.bf16.msra.mxu0 %v1251
      %1652 = vmatpush.bf16.msra.mxu0 %v1240
      %1653 = vmatpush.bf16.msra.mxu0 %v1229
      %1654 = vmatpush.bf16.msra.mxu0 %v1218
      %1655 = vmatpush.bf16.msra.mxu0 %v1207
      %1656 = vmatpush.bf16.msra.mxu0 %v1196
      %1657 = vmatpush.bf16.msra.mxu0 %v1185
      %1658 = vmatpush.bf16.msra.mxu0 %v1174
      %1659 = vmatmul.bf16.gmra.mxu0 %v531
      %v1660 = vpop.f32.mrf.mxu0
      %v1661 = vadd.f32 %v1648, %v1660
      %v1662 = vpop.f32.mrf.mxu0
      %1663 = vdwg.mxu0
      %1664 = vmatpush.bf16.msra.mxu0 %v1164
      %1665 = vmatpush.bf16.msra.mxu0 %v1153
      %1666 = vmatpush.bf16.msra.mxu0 %v1142
      %1667 = vmatpush.bf16.msra.mxu0 %v1131
      %1668 = vmatpush.bf16.msra.mxu0 %v1120
      %1669 = vmatpush.bf16.msra.mxu0 %v1109
      %1670 = vmatpush.bf16.msra.mxu0 %v1098
      %1671 = vmatpush.bf16.msra.mxu0 %v1087
      %1672 = vmatmul.bf16.gmra.mxu0 %v530
      %v1673 = vpop.f32.mrf.mxu0
      %v1674 = vadd.f32 0.0, %v1673
      %v1675 = vpop.f32.mrf.mxu0
      %1676 = vdwg.mxu0
      %1677 = vmatpush.bf16.msra.mxu0 %v1252
      %1678 = vmatpush.bf16.msra.mxu0 %v1241
      %1679 = vmatpush.bf16.msra.mxu0 %v1230
      %1680 = vmatpush.bf16.msra.mxu0 %v1219
      %1681 = vmatpush.bf16.msra.mxu0 %v1208
      %1682 = vmatpush.bf16.msra.mxu0 %v1197
      %1683 = vmatpush.bf16.msra.mxu0 %v1186
      %1684 = vmatpush.bf16.msra.mxu0 %v1175
      %1685 = vmatmul.bf16.gmra.mxu0 %v531
      %v1686 = vpop.f32.mrf.mxu0
      %v1687 = vadd.f32 %v1674, %v1686
      %v1688 = vpop.f32.mrf.mxu0
      %1689 = vdwg.mxu0
      %1690 = vmatpush.bf16.msra.mxu0 %v1165
      %1691 = vmatpush.bf16.msra.mxu0 %v1154
      %1692 = vmatpush.bf16.msra.mxu0 %v1143
      %1693 = vmatpush.bf16.msra.mxu0 %v1132
      %1694 = vmatpush.bf16.msra.mxu0 %v1121
      %1695 = vmatpush.bf16.msra.mxu0 %v1110
      %1696 = vmatpush.bf16.msra.mxu0 %v1099
      %1697 = vmatpush.bf16.msra.mxu0 %v1088
      %1698 = vmatmul.bf16.gmra.mxu0 %v530
      %v1699 = vpop.f32.mrf.mxu0
      %v1700 = vadd.f32 0.0, %v1699
      %v1701 = vpop.f32.mrf.mxu0
      %1702 = vdwg.mxu0
      %1703 = vmatpush.bf16.msra.mxu0 %v1253
      %1704 = vmatpush.bf16.msra.mxu0 %v1242
      %1705 = vmatpush.bf16.msra.mxu0 %v1231
      %1706 = vmatpush.bf16.msra.mxu0 %v1220
      %1707 = vmatpush.bf16.msra.mxu0 %v1209
      %1708 = vmatpush.bf16.msra.mxu0 %v1198
      %1709 = vmatpush.bf16.msra.mxu0 %v1187
      %1710 = vmatpush.bf16.msra.mxu0 %v1176
      %1711 = vmatmul.bf16.gmra.mxu0 %v531
      %v1712 = vpop.f32.mrf.mxu0
      %v1713 = vadd.f32 %v1700, %v1712
      %v1714 = vpop.f32.mrf.mxu0
      %1715 = vdwg.mxu0
      %v1716 = vld [vmem:[%s2] sm:$0xf]
      %1727 = vrot.lane.b32.xlu0 %v1453, 127
      %v1728 = vpop.permute.xlu0 %1727
      %1729 = vrot.lane.b32.xlu0 %v1479, 127
      %v1730 = vpop.permute.xlu0 %1729
      %1731 = vrot.lane.b32.xlu0 %v1505, 127
      %v1732 = vpop.permute.xlu0 %1731
      %1733 = vrot.lane.b32.xlu0 %v1531, 127
      %v1734 = vpop.permute.xlu0 %1733
      %1735 = vrot.lane.b32.xlu0 %v1557, 127
      %v1736 = vpop.permute.xlu0 %1735
      %1737 = vrot.lane.b32.xlu0 %v1583, 127
      %v1738 = vpop.permute.xlu0 %1737
      %1739 = vrot.lane.b32.xlu0 %v1609, 127
      %v1740 = vpop.permute.xlu0 %1739
      %1741 = vrot.lane.b32.xlu0 %v1635, 127
      %v1742 = vpop.permute.xlu0 %1741
      %1743 = vrot.lane.b32.xlu0 %v1661, 127
      %v1744 = vpop.permute.xlu0 %1743
      %1745 = vrot.lane.b32.xlu0 %v1687, 127
      %v1746 = vpop.permute.xlu0 %1745
      %vm1747 = vcmask 1039360
      %v1748 = vsel %vm1747, %v1728, %v1730
      %v1749 = vsel %vm1747, %v1730, %v1732
      %v1750 = vsel %vm1747, %v1732, %v1734
      %v1751 = vsel %vm1747, %v1734, %v1736
      %v1752 = vsel %vm1747, %v1736, %v1738
      %v1753 = vsel %vm1747, %v1738, %v1740
      %v1754 = vsel %vm1747, %v1740, %v1742
      %v1755 = vsel %vm1747, %v1742, %v1744
      %v1756 = vsel %vm1747, %v1744, %v1746
      %1767 = vrot.lane.b32.xlu0 %v1453, 126
      %v1768 = vpop.permute.xlu0 %1767
      %1769 = vrot.lane.b32.xlu0 %v1479, 126
      %v1770 = vpop.permute.xlu0 %1769
      %1771 = vrot.lane.b32.xlu0 %v1505, 126
      %v1772 = vpop.permute.xlu0 %1771
      %1773 = vrot.lane.b32.xlu0 %v1531, 126
      %v1774 = vpop.permute.xlu0 %1773
      %1775 = vrot.lane.b32.xlu0 %v1557, 126
      %v1776 = vpop.permute.xlu0 %1775
      %1777 = vrot.lane.b32.xlu0 %v1583, 126
      %v1778 = vpop.permute.xlu0 %1777
      %1779 = vrot.lane.b32.xlu0 %v1609, 126
      %v1780 = vpop.permute.xlu0 %1779
      %1781 = vrot.lane.b32.xlu0 %v1635, 126
      %v1782 = vpop.permute.xlu0 %1781
      %1783 = vrot.lane.b32.xlu0 %v1661, 126
      %v1784 = vpop.permute.xlu0 %1783
      %1785 = vrot.lane.b32.xlu0 %v1687, 126
      %v1786 = vpop.permute.xlu0 %1785
      %vm1787 = vcmask 1031168
      %v1788 = vsel %vm1787, %v1768, %v1770
      %v1789 = vsel %vm1787, %v1770, %v1772
      %v1790 = vsel %vm1787, %v1772, %v1774
      %v1791 = vsel %vm1787, %v1774, %v1776
      %v1792 = vsel %vm1787, %v1776, %v1778
      %v1793 = vsel %vm1787, %v1778, %v1780
      %v1794 = vsel %vm1787, %v1780, %v1782
      %v1795 = vsel %vm1787, %v1782, %v1784
      %v1796 = vsel %vm1787, %v1784, %v1786
      %1808 = vrot.lane.b32.xlu0 %v1453, 94
      %v1809 = vpop.permute.xlu0 %1808
      %1810 = vrot.lane.b32.xlu0 %v1479, 94
      %v1811 = vpop.permute.xlu0 %1810
      %1812 = vrot.lane.b32.xlu0 %v1505, 94
      %v1813 = vpop.permute.xlu0 %1812
      %1814 = vrot.lane.b32.xlu0 %v1531, 94
      %v1815 = vpop.permute.xlu0 %1814
      %1816 = vrot.lane.b32.xlu0 %v1557, 94
      %v1817 = vpop.permute.xlu0 %1816
      %1818 = vrot.lane.b32.xlu0 %v1583, 94
      %v1819 = vpop.permute.xlu0 %1818
      %1820 = vrot.lane.b32.xlu0 %v1609, 94
      %v1821 = vpop.permute.xlu0 %1820
      %1822 = vrot.lane.b32.xlu0 %v1635, 94
      %v1823 = vpop.permute.xlu0 %1822
      %1824 = vrot.lane.b32.xlu0 %v1661, 94
      %v1825 = vpop.permute.xlu0 %1824
      %1826 = vrot.lane.b32.xlu0 %v1687, 94
      %v1827 = vpop.permute.xlu0 %1826
      %1828 = vrot.lane.b32.xlu0 %v1713, 94
      %v1829 = vpop.permute.xlu0 %1828
      %vm1830 = vcmask 769024
      %v1831 = vsel %vm1830, %v1809, %v1811
      %v1832 = vsel %vm1830, %v1811, %v1813
      %v1833 = vsel %vm1830, %v1813, %v1815
      %v1834 = vsel %vm1830, %v1815, %v1817
      %v1835 = vsel %vm1830, %v1817, %v1819
      %v1836 = vsel %vm1830, %v1819, %v1821
      %v1837 = vsel %vm1830, %v1821, %v1823
      %v1838 = vsel %vm1830, %v1823, %v1825
      %v1839 = vsel %vm1830, %v1825, %v1827
      %v1840 = vsel %vm1830, %v1827, %v1829
      %1851 = vrot.lane.b32.xlu0 %v1479, 93
      %v1852 = vpop.permute.xlu0 %1851
      %1853 = vrot.lane.b32.xlu0 %v1505, 93
      %v1854 = vpop.permute.xlu0 %1853
      %1855 = vrot.lane.b32.xlu0 %v1531, 93
      %v1856 = vpop.permute.xlu0 %1855
      %1857 = vrot.lane.b32.xlu0 %v1557, 93
      %v1858 = vpop.permute.xlu0 %1857
      %1859 = vrot.lane.b32.xlu0 %v1583, 93
      %v1860 = vpop.permute.xlu0 %1859
      %1861 = vrot.lane.b32.xlu0 %v1609, 93
      %v1862 = vpop.permute.xlu0 %1861
      %1863 = vrot.lane.b32.xlu0 %v1635, 93
      %v1864 = vpop.permute.xlu0 %1863
      %1865 = vrot.lane.b32.xlu0 %v1661, 93
      %v1866 = vpop.permute.xlu0 %1865
      %1867 = vrot.lane.b32.xlu0 %v1687, 93
      %v1868 = vpop.permute.xlu0 %1867
      %1869 = vrot.lane.b32.xlu0 %v1713, 93
      %v1870 = vpop.permute.xlu0 %1869
      %vm1871 = vcmask 760832
      %v1872 = vsel %vm1871, %v1852, %v1854
      %v1873 = vsel %vm1871, %v1854, %v1856
      %v1874 = vsel %vm1871, %v1856, %v1858
      %v1875 = vsel %vm1871, %v1858, %v1860
      %v1876 = vsel %vm1871, %v1860, %v1862
      %v1877 = vsel %vm1871, %v1862, %v1864
      %v1878 = vsel %vm1871, %v1864, %v1866
      %v1879 = vsel %vm1871, %v1866, %v1868
      %v1880 = vsel %vm1871, %v1868, %v1870
      %1891 = vrot.lane.b32.xlu0 %v1479, 92
      %v1892 = vpop.permute.xlu0 %1891
      %1893 = vrot.lane.b32.xlu0 %v1505, 92
      %v1894 = vpop.permute.xlu0 %1893
      %1895 = vrot.lane.b32.xlu0 %v1531, 92
      %v1896 = vpop.permute.xlu0 %1895
      %1897 = vrot.lane.b32.xlu0 %v1557, 92
      %v1898 = vpop.permute.xlu0 %1897
      %1899 = vrot.lane.b32.xlu0 %v1583, 92
      %v1900 = vpop.permute.xlu0 %1899
      %1901 = vrot.lane.b32.xlu0 %v1609, 92
      %v1902 = vpop.permute.xlu0 %1901
      %1903 = vrot.lane.b32.xlu0 %v1635, 92
      %v1904 = vpop.permute.xlu0 %1903
      %1905 = vrot.lane.b32.xlu0 %v1661, 92
      %v1906 = vpop.permute.xlu0 %1905
      %1907 = vrot.lane.b32.xlu0 %v1687, 92
      %v1908 = vpop.permute.xlu0 %1907
      %1909 = vrot.lane.b32.xlu0 %v1713, 92
      %v1910 = vpop.permute.xlu0 %1909
      %vm1911 = vcmask 752640
      %v1912 = vsel %vm1911, %v1892, %v1894
      %v1913 = vsel %vm1911, %v1894, %v1896
      %v1914 = vsel %vm1911, %v1896, %v1898
      %v1915 = vsel %vm1911, %v1898, %v1900
      %v1916 = vsel %vm1911, %v1900, %v1902
      %v1917 = vsel %vm1911, %v1902, %v1904
      %v1918 = vsel %vm1911, %v1904, %v1906
      %v1919 = vsel %vm1911, %v1906, %v1908
      %v1920 = vsel %vm1911, %v1908, %v1910
      %1931 = vrot.lane.b32.xlu0 %v1479, 60
      %v1932 = vpop.permute.xlu0 %1931
      %1933 = vrot.lane.b32.xlu0 %v1505, 60
      %v1934 = vpop.permute.xlu0 %1933
      %1935 = vrot.lane.b32.xlu0 %v1531, 60
      %v1936 = vpop.permute.xlu0 %1935
      %1937 = vrot.lane.b32.xlu0 %v1557, 60
      %v1938 = vpop.permute.xlu0 %1937
      %1939 = vrot.lane.b32.xlu0 %v1583, 60
      %v1940 = vpop.permute.xlu0 %1939
      %1941 = vrot.lane.b32.xlu0 %v1609, 60
      %v1942 = vpop.permute.xlu0 %1941
      %1943 = vrot.lane.b32.xlu0 %v1635, 60
      %v1944 = vpop.permute.xlu0 %1943
      %1945 = vrot.lane.b32.xlu0 %v1661, 60
      %v1946 = vpop.permute.xlu0 %1945
      %1947 = vrot.lane.b32.xlu0 %v1687, 60
      %v1948 = vpop.permute.xlu0 %1947
      %1949 = vrot.lane.b32.xlu0 %v1713, 60
      %v1950 = vpop.permute.xlu0 %1949
      %vm1951 = vcmask 490496
      %v1952 = vsel %vm1951, %v1932, %v1934
      %v1953 = vsel %vm1951, %v1934, %v1936
      %v1954 = vsel %vm1951, %v1936, %v1938
      %v1955 = vsel %vm1951, %v1938, %v1940
      %v1956 = vsel %vm1951, %v1940, %v1942
      %v1957 = vsel %vm1951, %v1942, %v1944
      %v1958 = vsel %vm1951, %v1944, %v1946
      %v1959 = vsel %vm1951, %v1946, %v1948
      %v1960 = vsel %vm1951, %v1948, %v1950
      %1971 = vrot.lane.b32.xlu0 %v1479, 59
      %v1972 = vpop.permute.xlu0 %1971
      %1973 = vrot.lane.b32.xlu0 %v1505, 59
      %v1974 = vpop.permute.xlu0 %1973
      %1975 = vrot.lane.b32.xlu0 %v1531, 59
      %v1976 = vpop.permute.xlu0 %1975
      %1977 = vrot.lane.b32.xlu0 %v1557, 59
      %v1978 = vpop.permute.xlu0 %1977
      %1979 = vrot.lane.b32.xlu0 %v1583, 59
      %v1980 = vpop.permute.xlu0 %1979
      %1981 = vrot.lane.b32.xlu0 %v1609, 59
      %v1982 = vpop.permute.xlu0 %1981
      %1983 = vrot.lane.b32.xlu0 %v1635, 59
      %v1984 = vpop.permute.xlu0 %1983
      %1985 = vrot.lane.b32.xlu0 %v1661, 59
      %v1986 = vpop.permute.xlu0 %1985
      %1987 = vrot.lane.b32.xlu0 %v1687, 59
      %v1988 = vpop.permute.xlu0 %1987
      %1989 = vrot.lane.b32.xlu0 %v1713, 59
      %v1990 = vpop.permute.xlu0 %1989
      %vm1991 = vcmask 482304
      %v1992 = vsel %vm1991, %v1972, %v1974
      %v1993 = vsel %vm1991, %v1974, %v1976
      %v1994 = vsel %vm1991, %v1976, %v1978
      %v1995 = vsel %vm1991, %v1978, %v1980
      %v1996 = vsel %vm1991, %v1980, %v1982
      %v1997 = vsel %vm1991, %v1982, %v1984
      %v1998 = vsel %vm1991, %v1984, %v1986
      %v1999 = vsel %vm1991, %v1986, %v1988
      %v2000 = vsel %vm1991, %v1988, %v1990
      %2011 = vrot.lane.b32.xlu0 %v1479, 58
      %v2012 = vpop.permute.xlu0 %2011
      %2013 = vrot.lane.b32.xlu0 %v1505, 58
      %v2014 = vpop.permute.xlu0 %2013
      %2015 = vrot.lane.b32.xlu0 %v1531, 58
      %v2016 = vpop.permute.xlu0 %2015
      %2017 = vrot.lane.b32.xlu0 %v1557, 58
      %v2018 = vpop.permute.xlu0 %2017
      %2019 = vrot.lane.b32.xlu0 %v1583, 58
      %v2020 = vpop.permute.xlu0 %2019
      %2021 = vrot.lane.b32.xlu0 %v1609, 58
      %v2022 = vpop.permute.xlu0 %2021
      %2023 = vrot.lane.b32.xlu0 %v1635, 58
      %v2024 = vpop.permute.xlu0 %2023
      %2025 = vrot.lane.b32.xlu0 %v1661, 58
      %v2026 = vpop.permute.xlu0 %2025
      %2027 = vrot.lane.b32.xlu0 %v1687, 58
      %v2028 = vpop.permute.xlu0 %2027
      %2029 = vrot.lane.b32.xlu0 %v1713, 58
      %v2030 = vpop.permute.xlu0 %2029
      %vm2031 = vcmask 474112
      %v2032 = vsel %vm2031, %v2012, %v2014
      %v2033 = vsel %vm2031, %v2014, %v2016
      %v2034 = vsel %vm2031, %v2016, %v2018
      %v2035 = vsel %vm2031, %v2018, %v2020
      %v2036 = vsel %vm2031, %v2020, %v2022
      %v2037 = vsel %vm2031, %v2022, %v2024
      %v2038 = vsel %vm2031, %v2024, %v2026
      %v2039 = vsel %vm2031, %v2026, %v2028
      %v2040 = vsel %vm2031, %v2028, %v2030
      %v2051 = vpack.c.bf16 %v1748, %v1453
      %v2052 = vpack.c.bf16 %v1749, %v1479
      %v2053 = vpack.c.bf16 %v1750, %v1505
      %v2054 = vpack.c.bf16 %v1751, %v1531
      %v2055 = vpack.c.bf16 %v1752, %v1557
      %v2056 = vpack.c.bf16 %v1753, %v1583
      %v2057 = vpack.c.bf16 %v1754, %v1609
      %v2058 = vpack.c.bf16 %v1755, %v1635
      %v2059 = vpack.c.bf16 %v1756, %v1661
      %v2060 = vpack.c.bf16 %v1746, %v1687
      %v2061 = vpack.c.bf16 %v1831, %v1788
      %v2062 = vpack.c.bf16 %v1832, %v1789
      %v2063 = vpack.c.bf16 %v1833, %v1790
      %v2064 = vpack.c.bf16 %v1834, %v1791
      %v2065 = vpack.c.bf16 %v1835, %v1792
      %v2066 = vpack.c.bf16 %v1836, %v1793
      %v2067 = vpack.c.bf16 %v1837, %v1794
      %v2068 = vpack.c.bf16 %v1838, %v1795
      %v2069 = vpack.c.bf16 %v1839, %v1796
      %v2070 = vpack.c.bf16 %v1840, %v1786
      %v2071 = vpack.c.bf16 %v1892, %v1852
      %v2072 = vpack.c.bf16 %v1912, %v1872
      %v2073 = vpack.c.bf16 %v1913, %v1873
      %v2074 = vpack.c.bf16 %v1914, %v1874
      %v2075 = vpack.c.bf16 %v1915, %v1875
      %v2076 = vpack.c.bf16 %v1916, %v1876
      %v2077 = vpack.c.bf16 %v1917, %v1877
      %v2078 = vpack.c.bf16 %v1918, %v1878
      %v2079 = vpack.c.bf16 %v1919, %v1879
      %v2080 = vpack.c.bf16 %v1920, %v1880
      %v2081 = vpack.c.bf16 %v1972, %v1932
      %v2082 = vpack.c.bf16 %v1992, %v1952
      %v2083 = vpack.c.bf16 %v1993, %v1953
      %v2084 = vpack.c.bf16 %v1994, %v1954
      %v2085 = vpack.c.bf16 %v1995, %v1955
      %v2086 = vpack.c.bf16 %v1996, %v1956
      %v2087 = vpack.c.bf16 %v1997, %v1957
      %v2088 = vpack.c.bf16 %v1998, %v1958
      %v2089 = vpack.c.bf16 %v1999, %v1959
      %v2090 = vpack.c.bf16 %v2000, %v1960
      %v2091 = vpack.c.bf16 %v2012, %v2012
      %v2092 = vpack.c.bf16 %v2032, %v2032
      %v2093 = vpack.c.bf16 %v2033, %v2033
      %v2094 = vpack.c.bf16 %v2034, %v2034
      %v2095 = vpack.c.bf16 %v2035, %v2035
      %v2096 = vpack.c.bf16 %v2036, %v2036
      %v2097 = vpack.c.bf16 %v2037, %v2037
      %v2098 = vpack.c.bf16 %v2038, %v2038
      %v2099 = vpack.c.bf16 %v2039, %v2039
      %v2100 = vpack.c.bf16 %v2040, %v2040
      %2151 = vrot.lane.b32.xlu0 %v2051, 35
      %v2152 = vpop.permute.xlu0 %2151
      %2153 = vrot.lane.b32.xlu0 %v2052, 35
      %v2154 = vpop.permute.xlu0 %2153
      %2155 = vrot.lane.b32.xlu0 %v2053, 35
      %v2156 = vpop.permute.xlu0 %2155
      %2157 = vrot.lane.b32.xlu0 %v2054, 35
      %v2158 = vpop.permute.xlu0 %2157
      %2159 = vrot.lane.b32.xlu0 %v2055, 35
      %v2160 = vpop.permute.xlu0 %2159
      %2161 = vrot.lane.b32.xlu0 %v2056, 35
      %v2162 = vpop.permute.xlu0 %2161
      %2163 = vrot.lane.b32.xlu0 %v2057, 35
      %v2164 = vpop.permute.xlu0 %2163
      %2165 = vrot.lane.b32.xlu0 %v2058, 35
      %v2166 = vpop.permute.xlu0 %2165
      %2167 = vrot.lane.b32.xlu0 %v2059, 35
      %v2168 = vpop.permute.xlu0 %2167
      %2169 = vrot.lane.b32.xlu0 %v2060, 35
      %v2170 = vpop.permute.xlu0 %2169
      %2171 = vrot.lane.b32.xlu0 %v2061, 35
      %v2172 = vpop.permute.xlu0 %2171
      %2173 = vrot.lane.b32.xlu0 %v2062, 35
      %v2174 = vpop.permute.xlu0 %2173
      %2175 = vrot.lane.b32.xlu0 %v2063, 35
      %v2176 = vpop.permute.xlu0 %2175
      %2177 = vrot.lane.b32.xlu0 %v2064, 35
      %v2178 = vpop.permute.xlu0 %2177
      %2179 = vrot.lane.b32.xlu0 %v2065, 35
      %v2180 = vpop.permute.xlu0 %2179
      %2181 = vrot.lane.b32.xlu0 %v2066, 35
      %v2182 = vpop.permute.xlu0 %2181
      %2183 = vrot.lane.b32.xlu0 %v2067, 35
      %v2184 = vpop.permute.xlu0 %2183
      %2185 = vrot.lane.b32.xlu0 %v2068, 35
      %v2186 = vpop.permute.xlu0 %2185
      %2187 = vrot.lane.b32.xlu0 %v2069, 35
      %v2188 = vpop.permute.xlu0 %2187
      %2189 = vrot.lane.b32.xlu0 %v2070, 35
      %v2190 = vpop.permute.xlu0 %2189
      %2191 = vrot.lane.b32.xlu0 %v2071, 35
      %v2192 = vpop.permute.xlu0 %2191
      %2193 = vrot.lane.b32.xlu0 %v2072, 35
      %v2194 = vpop.permute.xlu0 %2193
      %2195 = vrot.lane.b32.xlu0 %v2073, 35
      %v2196 = vpop.permute.xlu0 %2195
      %2197 = vrot.lane.b32.xlu0 %v2074, 35
      %v2198 = vpop.permute.xlu0 %2197
      %2199 = vrot.lane.b32.xlu0 %v2075, 35
      %v2200 = vpop.permute.xlu0 %2199
      %2201 = vrot.lane.b32.xlu0 %v2076, 35
      %v2202 = vpop.permute.xlu0 %2201
      %2203 = vrot.lane.b32.xlu0 %v2077, 35
      %v2204 = vpop.permute.xlu0 %2203
      %2205 = vrot.lane.b32.xlu0 %v2078, 35
      %v2206 = vpop.permute.xlu0 %2205
      %2207 = vrot.lane.b32.xlu0 %v2079, 35
      %v2208 = vpop.permute.xlu0 %2207
      %2209 = vrot.lane.b32.xlu0 %v2080, 35
      %v2210 = vpop.permute.xlu0 %2209
      %2211 = vrot.lane.b32.xlu0 %v2081, 35
      %v2212 = vpop.permute.xlu0 %2211
      %2213 = vrot.lane.b32.xlu0 %v2082, 35
      %v2214 = vpop.permute.xlu0 %2213
      %2215 = vrot.lane.b32.xlu0 %v2083, 35
      %v2216 = vpop.permute.xlu0 %2215
      %2217 = vrot.lane.b32.xlu0 %v2084, 35
      %v2218 = vpop.permute.xlu0 %2217
      %2219 = vrot.lane.b32.xlu0 %v2085, 35
      %v2220 = vpop.permute.xlu0 %2219
      %2221 = vrot.lane.b32.xlu0 %v2086, 35
      %v2222 = vpop.permute.xlu0 %2221
      %2223 = vrot.lane.b32.xlu0 %v2087, 35
      %v2224 = vpop.permute.xlu0 %2223
      %2225 = vrot.lane.b32.xlu0 %v2088, 35
      %v2226 = vpop.permute.xlu0 %2225
      %2227 = vrot.lane.b32.xlu0 %v2089, 35
      %v2228 = vpop.permute.xlu0 %2227
      %2229 = vrot.lane.b32.xlu0 %v2090, 35
      %v2230 = vpop.permute.xlu0 %2229
      %2231 = vrot.lane.b32.xlu0 %v2091, 35
      %v2232 = vpop.permute.xlu0 %2231
      %2233 = vrot.lane.b32.xlu0 %v2092, 35
      %v2234 = vpop.permute.xlu0 %2233
      %2235 = vrot.lane.b32.xlu0 %v2093, 35
      %v2236 = vpop.permute.xlu0 %2235
      %2237 = vrot.lane.b32.xlu0 %v2094, 35
      %v2238 = vpop.permute.xlu0 %2237
      %2239 = vrot.lane.b32.xlu0 %v2095, 35
      %v2240 = vpop.permute.xlu0 %2239
      %2241 = vrot.lane.b32.xlu0 %v2096, 35
      %v2242 = vpop.permute.xlu0 %2241
      %2243 = vrot.lane.b32.xlu0 %v2097, 35
      %v2244 = vpop.permute.xlu0 %2243
      %2245 = vrot.lane.b32.xlu0 %v2098, 35
      %v2246 = vpop.permute.xlu0 %2245
      %2247 = vrot.lane.b32.xlu0 %v2099, 35
      %v2248 = vpop.permute.xlu0 %2247
      %2249 = vrot.lane.b32.xlu0 %v2100, 35
      %v2250 = vpop.permute.xlu0 %2249
      %vm2251 = vcmask 285696
      %v2252 = vsel %vm2251, %v2152, %v2154
      %v2253 = vsel %vm2251, %v2154, %v2156
      %v2254 = vsel %vm2251, %v2156, %v2158
      %v2255 = vsel %vm2251, %v2158, %v2160
      %v2256 = vsel %vm2251, %v2160, %v2162
      %v2257 = vsel %vm2251, %v2162, %v2164
      %v2258 = vsel %vm2251, %v2164, %v2166
      %v2259 = vsel %vm2251, %v2166, %v2168
      %v2260 = vsel %vm2251, %v2168, %v2170
      %v2261 = vsel %vm2251, %v2172, %v2174
      %v2262 = vsel %vm2251, %v2174, %v2176
      %v2263 = vsel %vm2251, %v2176, %v2178
      %v2264 = vsel %vm2251, %v2178, %v2180
      %v2265 = vsel %vm2251, %v2180, %v2182
      %v2266 = vsel %vm2251, %v2182, %v2184
      %v2267 = vsel %vm2251, %v2184, %v2186
      %v2268 = vsel %vm2251, %v2186, %v2188
      %v2269 = vsel %vm2251, %v2188, %v2190
      %v2270 = vsel %vm2251, %v2192, %v2194
      %v2271 = vsel %vm2251, %v2194, %v2196
      %v2272 = vsel %vm2251, %v2196, %v2198
      %v2273 = vsel %vm2251, %v2198, %v2200
      %v2274 = vsel %vm2251, %v2200, %v2202
      %v2275 = vsel %vm2251, %v2202, %v2204
      %v2276 = vsel %vm2251, %v2204, %v2206
      %v2277 = vsel %vm2251, %v2206, %v2208
      %v2278 = vsel %vm2251, %v2208, %v2210
      %v2279 = vsel %vm2251, %v2212, %v2214
      %v2280 = vsel %vm2251, %v2214, %v2216
      %v2281 = vsel %vm2251, %v2216, %v2218
      %v2282 = vsel %vm2251, %v2218, %v2220
      %v2283 = vsel %vm2251, %v2220, %v2222
      %v2284 = vsel %vm2251, %v2222, %v2224
      %v2285 = vsel %vm2251, %v2224, %v2226
      %v2286 = vsel %vm2251, %v2226, %v2228
      %v2287 = vsel %vm2251, %v2228, %v2230
      %v2288 = vsel %vm2251, %v2232, %v2234
      %v2289 = vsel %vm2251, %v2234, %v2236
      %v2290 = vsel %vm2251, %v2236, %v2238
      %v2291 = vsel %vm2251, %v2238, %v2240
      %v2292 = vsel %vm2251, %v2240, %v2242
      %v2293 = vsel %vm2251, %v2242, %v2244
      %v2294 = vsel %vm2251, %v2244, %v2246
      %v2295 = vsel %vm2251, %v2246, %v2248
      %v2296 = vsel %vm2251, %v2248, %v2250
      %vm2337 = vcmask 588800
      %v2339 = vsel %vm2337, %v1716, 0
      %vm2341 = vcmask 1043456
      %v2343 = vsel %vm2341, %v2288, 0
      %v2346 = vsel %vm2341, %v2289, 0
      %v2349 = vsel %vm2341, %v2290, 0
      %v2352 = vsel %vm2341, %v2291, 0
      %v2355 = vsel %vm2341, %v2292, 0
      %v2358 = vsel %vm2341, %v2293, 0
      %v2361 = vsel %vm2341, %v2294, 0
      %v2364 = vsel %vm2341, %v2295, 0
      %v2367 = vsel %vm2341, %v2296, 0
      %v2370 = vsel %vm2341, %v2250, 0
      %2372 = vmatpush.bf16.msra.mxu0 0
      %2373 = vmatpush.bf16.msra.mxu0 0
      %2374 = vmatpush.bf16.msra.mxu0 0
      %2375 = vmatpush.bf16.msra.mxu0 %v2343
      %2376 = vmatpush.bf16.msra.mxu0 %v2279
      %2377 = vmatpush.bf16.msra.mxu0 %v2270
      %2378 = vmatpush.bf16.msra.mxu0 %v2261
      %2379 = vmatpush.bf16.msra.mxu0 %v2252
      %2380 = vmatmul.bf16.gmra.mxu0 %v2339
      %v2381 = vpop.f32.mrf.mxu0
      %v2382 = vadd.f32 0.0, %v2381
      %v2383 = vpop.f32.mrf.mxu0
      %2384 = vdwg.mxu0
      %2385 = vmatpush.bf16.msra.mxu0 0
      %2386 = vmatpush.bf16.msra.mxu0 0
      %2387 = vmatpush.bf16.msra.mxu0 0
      %2388 = vmatpush.bf16.msra.mxu0 %v2346
      %2389 = vmatpush.bf16.msra.mxu0 %v2280
      %2390 = vmatpush.bf16.msra.mxu0 %v2271
      %2391 = vmatpush.bf16.msra.mxu0 %v2262
      %2392 = vmatpush.bf16.msra.mxu0 %v2253
      %2393 = vmatmul.bf16.gmra.mxu0 %v2339
      %v2394 = vpop.f32.mrf.mxu0
      %v2395 = vadd.f32 0.0, %v2394
      %v2396 = vpop.f32.mrf.mxu0
      %2397 = vdwg.mxu0
      %2398 = vmatpush.bf16.msra.mxu0 0
      %2399 = vmatpush.bf16.msra.mxu0 0
      %2400 = vmatpush.bf16.msra.mxu0 0
      %2401 = vmatpush.bf16.msra.mxu0 %v2349
      %2402 = vmatpush.bf16.msra.mxu0 %v2281
      %2403 = vmatpush.bf16.msra.mxu0 %v2272
      %2404 = vmatpush.bf16.msra.mxu0 %v2263
      %2405 = vmatpush.bf16.msra.mxu0 %v2254
      %2406 = vmatmul.bf16.gmra.mxu0 %v2339
      %v2407 = vpop.f32.mrf.mxu0
      %v2408 = vadd.f32 0.0, %v2407
      %v2409 = vpop.f32.mrf.mxu0
      %2410 = vdwg.mxu0
      %2411 = vmatpush.bf16.msra.mxu0 0
      %2412 = vmatpush.bf16.msra.mxu0 0
      %2413 = vmatpush.bf16.msra.mxu0 0
      %2414 = vmatpush.bf16.msra.mxu0 %v2352
      %2415 = vmatpush.bf16.msra.mxu0 %v2282
      %2416 = vmatpush.bf16.msra.mxu0 %v2273
      %2417 = vmatpush.bf16.msra.mxu0 %v2264
      %2418 = vmatpush.bf16.msra.mxu0 %v2255
      %2419 = vmatmul.bf16.gmra.mxu0 %v2339
      %v2420 = vpop.f32.mrf.mxu0
      %v2421 = vadd.f32 0.0, %v2420
      %v2422 = vpop.f32.mrf.mxu0
      %2423 = vdwg.mxu0
      %2424 = vmatpush.bf16.msra.mxu0 0
      %2425 = vmatpush.bf16.msra.mxu0 0
      %2426 = vmatpush.bf16.msra.mxu0 0
      %2427 = vmatpush.bf16.msra.mxu0 %v2355
      %2428 = vmatpush.bf16.msra.mxu0 %v2283
      %2429 = vmatpush.bf16.msra.mxu0 %v2274
      %2430 = vmatpush.bf16.msra.mxu0 %v2265
      %2431 = vmatpush.bf16.msra.mxu0 %v2256
      %2432 = vmatmul.bf16.gmra.mxu0 %v2339
      %v2433 = vpop.f32.mrf.mxu0
      %v2434 = vadd.f32 0.0, %v2433
      %v2435 = vpop.f32.mrf.mxu0
      %2436 = vdwg.mxu0
      %2437 = vmatpush.bf16.msra.mxu0 0
      %2438 = vmatpush.bf16.msra.mxu0 0
      %2439 = vmatpush.bf16.msra.mxu0 0
      %2440 = vmatpush.bf16.msra.mxu0 %v2358
      %2441 = vmatpush.bf16.msra.mxu0 %v2284
      %2442 = vmatpush.bf16.msra.mxu0 %v2275
      %2443 = vmatpush.bf16.msra.mxu0 %v2266
      %2444 = vmatpush.bf16.msra.mxu0 %v2257
      %2445 = vmatmul.bf16.gmra.mxu0 %v2339
      %v2446 = vpop.f32.mrf.mxu0
      %v2447 = vadd.f32 0.0, %v2446
      %v2448 = vpop.f32.mrf.mxu0
      %2449 = vdwg.mxu0
      %2450 = vmatpush.bf16.msra.mxu0 0
      %2451 = vmatpush.bf16.msra.mxu0 0
      %2452 = vmatpush.bf16.msra.mxu0 0
      %2453 = vmatpush.bf16.msra.mxu0 %v2361
      %2454 = vmatpush.bf16.msra.mxu0 %v2285
      %2455 = vmatpush.bf16.msra.mxu0 %v2276
      %2456 = vmatpush.bf16.msra.mxu0 %v2267
      %2457 = vmatpush.bf16.msra.mxu0 %v2258
      %2458 = vmatmul.bf16.gmra.mxu0 %v2339
      %v2459 = vpop.f32.mrf.mxu0
      %v2460 = vadd.f32 0.0, %v2459
      %v2461 = vpop.f32.mrf.mxu0
      %2462 = vdwg.mxu0
      %2463 = vmatpush.bf16.msra.mxu0 0
      %2464 = vmatpush.bf16.msra.mxu0 0
      %2465 = vmatpush.bf16.msra.mxu0 0
      %2466 = vmatpush.bf16.msra.mxu0 %v2364
      %2467 = vmatpush.bf16.msra.mxu0 %v2286
      %2468 = vmatpush.bf16.msra.mxu0 %v2277
      %2469 = vmatpush.bf16.msra.mxu0 %v2268
      %2470 = vmatpush.bf16.msra.mxu0 %v2259
      %2471 = vmatmul.bf16.gmra.mxu0 %v2339
      %v2472 = vpop.f32.mrf.mxu0
      %v2473 = vadd.f32 0.0, %v2472
      %v2474 = vpop.f32.mrf.mxu0
      %2475 = vdwg.mxu0
      %2476 = vmatpush.bf16.msra.mxu0 0
      %2477 = vmatpush.bf16.msra.mxu0 0
      %2478 = vmatpush.bf16.msra.mxu0 0
      %2479 = vmatpush.bf16.msra.mxu0 %v2367
      %2480 = vmatpush.bf16.msra.mxu0 %v2287
      %2481 = vmatpush.bf16.msra.mxu0 %v2278
      %2482 = vmatpush.bf16.msra.mxu0 %v2269
      %2483 = vmatpush.bf16.msra.mxu0 %v2260
      %2484 = vmatmul.bf16.gmra.mxu0 %v2339
      %v2485 = vpop.f32.mrf.mxu0
      %v2486 = vadd.f32 0.0, %v2485
      %v2487 = vpop.f32.mrf.mxu0
      %2488 = vdwg.mxu0
      %2489 = vmatpush.bf16.msra.mxu0 0
      %2490 = vmatpush.bf16.msra.mxu0 0
      %2491 = vmatpush.bf16.msra.mxu0 0
      %2492 = vmatpush.bf16.msra.mxu0 %v2370
      %2493 = vmatpush.bf16.msra.mxu0 %v2230
      %2494 = vmatpush.bf16.msra.mxu0 %v2210
      %2495 = vmatpush.bf16.msra.mxu0 %v2190
      %2496 = vmatpush.bf16.msra.mxu0 %v2170
      %2497 = vmatmul.bf16.gmra.mxu0 %v2339
      %v2498 = vpop.f32.mrf.mxu0
      %v2499 = vadd.f32 0.0, %v2498
      %v2500 = vpop.f32.mrf.mxu0
      %2501 = vdwg.mxu0
      %v2502 = vld [vmem:[%s4] sm:$0xff]
      %2504 = vset.pattern.permute.xlu0 0
      %2505 = vperm.xlu0 %2504, %v2502
      %v2506 = vpop.permute.xlu0 %2505
      %v2508 = vmul.f32 %v2382, %v2506
      %v2509 = vmul.f32 %v2395, %v2506
      %v2510 = vmul.f32 %v2408, %v2506
      %v2511 = vmul.f32 %v2421, %v2506
      %v2512 = vmul.f32 %v2434, %v2506
      %v2513 = vmul.f32 %v2447, %v2506
      %v2514 = vmul.f32 %v2460, %v2506
      %v2515 = vmul.f32 %v2473, %v2506
      %v2516 = vmul.f32 %v2486, %v2506
      %v2517 = vmul.f32 %v2499, %v2506
      %v2518 = vld [vmem:[%s5] sm:$0xff]
      %2520 = vset.pattern.permute.xlu0 0
      %2521 = vperm.xlu0 %2520, %v2518
      %v2522 = vpop.permute.xlu0 %2521
      %v2524 = vadd.f32 %v2508, %v2522
      %v2525 = vadd.f32 %v2509, %v2522
      %v2526 = vadd.f32 %v2510, %v2522
      %v2527 = vadd.f32 %v2511, %v2522
      %v2528 = vadd.f32 %v2512, %v2522
      %v2529 = vadd.f32 %v2513, %v2522
      %v2530 = vadd.f32 %v2514, %v2522
      %v2531 = vadd.f32 %v2515, %v2522
      %v2532 = vadd.f32 %v2516, %v2522
      %v2533 = vadd.f32 %v2517, %v2522
      %v2534 = vmax.f32 %v2524, 0.0
      %v2535 = vmax.f32 %v2525, 0.0
      %v2536 = vmax.f32 %v2526, 0.0
      %v2537 = vmax.f32 %v2527, 0.0
      %v2538 = vmax.f32 %v2528, 0.0
      %v2539 = vmax.f32 %v2529, 0.0
      %v2540 = vmax.f32 %v2530, 0.0
      %v2541 = vmax.f32 %v2531, 0.0
      %v2542 = vmax.f32 %v2532, 0.0
      %v2543 = vmax.f32 %v2533, 0.0
      %v2544 = vld [vmem:[%s8] sm:$0xff]
      %v2545 = vld [vmem:[%s8 + $0x8] sm:$0x3]
      %v2548 = vperm.slane %v2544, 0
      %v2549 = vperm.slane %v2544, 1
      %v2550 = vperm.slane %v2544, 2
      %v2551 = vperm.slane %v2544, 3
      %v2552 = vperm.slane %v2544, 4
      %v2553 = vperm.slane %v2544, 5
      %v2554 = vperm.slane %v2544, 6
      %v2555 = vperm.slane %v2544, 7
      %v2556 = vperm.slane %v2545, 0
      %v2557 = vperm.slane %v2545, 1
      %v2568 = vmul.f32 %v2534, %v2548
      %v2569 = vmul.f32 %v2535, %v2549
      %v2570 = vmul.f32 %v2536, %v2550
      %v2571 = vmul.f32 %v2537, %v2551
      %v2572 = vmul.f32 %v2538, %v2552
      %v2573 = vmul.f32 %v2539, %v2553
      %v2574 = vmul.f32 %v2540, %v2554
      %v2575 = vmul.f32 %v2541, %v2555
      %v2576 = vmul.f32 %v2542, %v2556
      %v2577 = vmul.f32 %v2543, %v2557
      %2578 = vst [vmem:[#allocation2] sm:$0xff] 0.0
      %2579 = vst [vmem:[#allocation2 + $0x8] sm:$0xff] %v2568
      %2580 = vst [vmem:[#allocation2 + $0x10] sm:$0xff] %v2569
      %2581 = vst [vmem:[#allocation2 + $0x18] sm:$0xff] %v2570
      %2582 = vst [vmem:[#allocation2 + $0x20] sm:$0xff] %v2571
      %2583 = vst [vmem:[#allocation2 + $0x28] sm:$0xff] %v2572
      %2584 = vst [vmem:[#allocation2 + $0x30] sm:$0xff] %v2573
      %2585 = vst [vmem:[#allocation2 + $0x38] sm:$0xff] %v2574
      %2586 = vst [vmem:[#allocation2 + $0x40] sm:$0xff] %v2575
      %2587 = vst [vmem:[#allocation2 + $0x48] sm:$0xff] %v2576
      %vm2588 = vcmask 31744
      %2589 = vst.msk [vmem:[#allocation2 + $0x50] sm:$0xff] %vm2588, %v2577
      %vm2590 = vcmask 1047584
      %2591 = vst.msk [vmem:[#allocation2 + $0x50] sm:$0xff] %vm2590, 0.0
      %v2592 = vld [vmem:[%s3] sm:$0xf]
      %v2593 = vld [vmem:[#allocation2] sm:$0xff]
      %v2594 = vld [vmem:[#allocation2 + $0x8] sm:$0xff]
      %v2595 = vld [vmem:[#allocation2 + $0x10] sm:$0xff]
      %v2596 = vld [vmem:[#allocation2 + $0x18] sm:$0xff]
      %v2597 = vld [vmem:[#allocation2 + $0x20] sm:$0xff]
      %v2598 = vld [vmem:[#allocation2 + $0x28] sm:$0xff]
      %v2599 = vld [vmem:[#allocation2 + $0x30] sm:$0xff]
      %v2600 = vld [vmem:[#allocation2 + $0x38] sm:$0xff]
      %v2601 = vld [vmem:[#allocation2 + $0x40] sm:$0xff]
      %v2602 = vld [vmem:[#allocation2 + $0x48] sm:$0xff]
      %v2603 = vld [vmem:[#allocation2] sm:$0xff]
      %v2604 = vld [vmem:[#allocation2 + $0x8] sm:$0xff]
      %v2605 = vld [vmem:[#allocation2 + $0x10] sm:$0xff]
      %v2606 = vld [vmem:[#allocation2 + $0x18] sm:$0xff]
      %v2607 = vld [vmem:[#allocation2 + $0x20] sm:$0xff]
      %v2608 = vld [vmem:[#allocation2 + $0x28] sm:$0xff]
      %v2609 = vld [vmem:[#allocation2 + $0x30] sm:$0xff]
      %v2610 = vld [vmem:[#allocation2 + $0x38] sm:$0xff]
      %v2611 = vld [vmem:[#allocation2 + $0x40] sm:$0xff]
      %v2612 = vld [vmem:[#allocation2 + $0x48] sm:$0xff]
      %v2613 = vld [vmem:[#allocation2 + $0x50] sm:$0xff]
      %2624 = vrot.lane.b32.xlu0 %v2593, 127
      %v2625 = vpop.permute.xlu0 %2624
      %2626 = vrot.lane.b32.xlu0 %v2594, 127
      %v2627 = vpop.permute.xlu0 %2626
      %2628 = vrot.lane.b32.xlu0 %v2595, 127
      %v2629 = vpop.permute.xlu0 %2628
      %2630 = vrot.lane.b32.xlu0 %v2596, 127
      %v2631 = vpop.permute.xlu0 %2630
      %2632 = vrot.lane.b32.xlu0 %v2597, 127
      %v2633 = vpop.permute.xlu0 %2632
      %2634 = vrot.lane.b32.xlu0 %v2598, 127
      %v2635 = vpop.permute.xlu0 %2634
      %2636 = vrot.lane.b32.xlu0 %v2599, 127
      %v2637 = vpop.permute.xlu0 %2636
      %2638 = vrot.lane.b32.xlu0 %v2600, 127
      %v2639 = vpop.permute.xlu0 %2638
      %2640 = vrot.lane.b32.xlu0 %v2601, 127
      %v2641 = vpop.permute.xlu0 %2640
      %2642 = vrot.lane.b32.xlu0 %v2602, 127
      %v2643 = vpop.permute.xlu0 %2642
      %v2644 = vsel %vm1747, %v2625, %v2627
      %v2645 = vsel %vm1747, %v2627, %v2629
      %v2646 = vsel %vm1747, %v2629, %v2631
      %v2647 = vsel %vm1747, %v2631, %v2633
      %v2648 = vsel %vm1747, %v2633, %v2635
      %v2649 = vsel %vm1747, %v2635, %v2637
      %v2650 = vsel %vm1747, %v2637, %v2639
      %v2651 = vsel %vm1747, %v2639, %v2641
      %v2652 = vsel %vm1747, %v2641, %v2643
      %2663 = vrot.lane.b32.xlu0 %v2593, 126
      %v2664 = vpop.permute.xlu0 %2663
      %2665 = vrot.lane.b32.xlu0 %v2594, 126
      %v2666 = vpop.permute.xlu0 %2665
      %2667 = vrot.lane.b32.xlu0 %v2595, 126
      %v2668 = vpop.permute.xlu0 %2667
      %2669 = vrot.lane.b32.xlu0 %v2596, 126
      %v2670 = vpop.permute.xlu0 %2669
      %2671 = vrot.lane.b32.xlu0 %v2597, 126
      %v2672 = vpop.permute.xlu0 %2671
      %2673 = vrot.lane.b32.xlu0 %v2598, 126
      %v2674 = vpop.permute.xlu0 %2673
      %2675 = vrot.lane.b32.xlu0 %v2599, 126
      %v2676 = vpop.permute.xlu0 %2675
      %2677 = vrot.lane.b32.xlu0 %v2600, 126
      %v2678 = vpop.permute.xlu0 %2677
      %2679 = vrot.lane.b32.xlu0 %v2601, 126
      %v2680 = vpop.permute.xlu0 %2679
      %2681 = vrot.lane.b32.xlu0 %v2602, 126
      %v2682 = vpop.permute.xlu0 %2681
      %v2683 = vsel %vm1787, %v2664, %v2666
      %v2684 = vsel %vm1787, %v2666, %v2668
      %v2685 = vsel %vm1787, %v2668, %v2670
      %v2686 = vsel %vm1787, %v2670, %v2672
      %v2687 = vsel %vm1787, %v2672, %v2674
      %v2688 = vsel %vm1787, %v2674, %v2676
      %v2689 = vsel %vm1787, %v2676, %v2678
      %v2690 = vsel %vm1787, %v2678, %v2680
      %v2691 = vsel %vm1787, %v2680, %v2682
      %2713 = vrot.lane.b32.xlu0 %v2603, 94
      %v2714 = vpop.permute.xlu0 %2713
      %2715 = vrot.lane.b32.xlu0 %v2604, 94
      %v2716 = vpop.permute.xlu0 %2715
      %2717 = vrot.lane.b32.xlu0 %v2605, 94
      %v2718 = vpop.permute.xlu0 %2717
      %2719 = vrot.lane.b32.xlu0 %v2606, 94
      %v2720 = vpop.permute.xlu0 %2719
      %2721 = vrot.lane.b32.xlu0 %v2607, 94
      %v2722 = vpop.permute.xlu0 %2721
      %2723 = vrot.lane.b32.xlu0 %v2608, 94
      %v2724 = vpop.permute.xlu0 %2723
      %2725 = vrot.lane.b32.xlu0 %v2609, 94
      %v2726 = vpop.permute.xlu0 %2725
      %2727 = vrot.lane.b32.xlu0 %v2610, 94
      %v2728 = vpop.permute.xlu0 %2727
      %2729 = vrot.lane.b32.xlu0 %v2611, 94
      %v2730 = vpop.permute.xlu0 %2729
      %2731 = vrot.lane.b32.xlu0 %v2612, 94
      %v2732 = vpop.permute.xlu0 %2731
      %2733 = vrot.lane.b32.xlu0 %v2613, 94
      %v2734 = vpop.permute.xlu0 %2733
      %v2735 = vsel %vm1830, %v2714, %v2716
      %v2736 = vsel %vm1830, %v2716, %v2718
      %v2737 = vsel %vm1830, %v2718, %v2720
      %v2738 = vsel %vm1830, %v2720, %v2722
      %v2739 = vsel %vm1830, %v2722, %v2724
      %v2740 = vsel %vm1830, %v2724, %v2726
      %v2741 = vsel %vm1830, %v2726, %v2728
      %v2742 = vsel %vm1830, %v2728, %v2730
      %v2743 = vsel %vm1830, %v2730, %v2732
      %v2744 = vsel %vm1830, %v2732, %v2734
      %2755 = vrot.lane.b32.xlu0 %v2604, 93
      %v2756 = vpop.permute.xlu0 %2755
      %2757 = vrot.lane.b32.xlu0 %v2605, 93
      %v2758 = vpop.permute.xlu0 %2757
      %2759 = vrot.lane.b32.xlu0 %v2606, 93
      %v2760 = vpop.permute.xlu0 %2759
      %2761 = vrot.lane.b32.xlu0 %v2607, 93
      %v2762 = vpop.permute.xlu0 %2761
      %2763 = vrot.lane.b32.xlu0 %v2608, 93
      %v2764 = vpop.permute.xlu0 %2763
      %2765 = vrot.lane.b32.xlu0 %v2609, 93
      %v2766 = vpop.permute.xlu0 %2765
      %2767 = vrot.lane.b32.xlu0 %v2610, 93
      %v2768 = vpop.permute.xlu0 %2767
      %2769 = vrot.lane.b32.xlu0 %v2611, 93
      %v2770 = vpop.permute.xlu0 %2769
      %2771 = vrot.lane.b32.xlu0 %v2612, 93
      %v2772 = vpop.permute.xlu0 %2771
      %2773 = vrot.lane.b32.xlu0 %v2613, 93
      %v2774 = vpop.permute.xlu0 %2773
      %v2775 = vsel %vm1871, %v2756, %v2758
      %v2776 = vsel %vm1871, %v2758, %v2760
      %v2777 = vsel %vm1871, %v2760, %v2762
      %v2778 = vsel %vm1871, %v2762, %v2764
      %v2779 = vsel %vm1871, %v2764, %v2766
      %v2780 = vsel %vm1871, %v2766, %v2768
      %v2781 = vsel %vm1871, %v2768, %v2770
      %v2782 = vsel %vm1871, %v2770, %v2772
      %v2783 = vsel %vm1871, %v2772, %v2774
      %2794 = vrot.lane.b32.xlu0 %v2604, 92
      %v2795 = vpop.permute.xlu0 %2794
      %2796 = vrot.lane.b32.xlu0 %v2605, 92
      %v2797 = vpop.permute.xlu0 %2796
      %2798 = vrot.lane.b32.xlu0 %v2606, 92
      %v2799 = vpop.permute.xlu0 %2798
      %2800 = vrot.lane.b32.xlu0 %v2607, 92
      %v2801 = vpop.permute.xlu0 %2800
      %2802 = vrot.lane.b32.xlu0 %v2608, 92
      %v2803 = vpop.permute.xlu0 %2802
      %2804 = vrot.lane.b32.xlu0 %v2609, 92
      %v2805 = vpop.permute.xlu0 %2804
      %2806 = vrot.lane.b32.xlu0 %v2610, 92
      %v2807 = vpop.permute.xlu0 %2806
      %2808 = vrot.lane.b32.xlu0 %v2611, 92
      %v2809 = vpop.permute.xlu0 %2808
      %2810 = vrot.lane.b32.xlu0 %v2612, 92
      %v2811 = vpop.permute.xlu0 %2810
      %2812 = vrot.lane.b32.xlu0 %v2613, 92
      %v2813 = vpop.permute.xlu0 %2812
      %v2814 = vsel %vm1911, %v2795, %v2797
      %v2815 = vsel %vm1911, %v2797, %v2799
      %v2816 = vsel %vm1911, %v2799, %v2801
      %v2817 = vsel %vm1911, %v2801, %v2803
      %v2818 = vsel %vm1911, %v2803, %v2805
      %v2819 = vsel %vm1911, %v2805, %v2807
      %v2820 = vsel %vm1911, %v2807, %v2809
      %v2821 = vsel %vm1911, %v2809, %v2811
      %v2822 = vsel %vm1911, %v2811, %v2813
      %2833 = vrot.lane.b32.xlu0 %v2604, 60
      %v2834 = vpop.permute.xlu0 %2833
      %2835 = vrot.lane.b32.xlu0 %v2605, 60
      %v2836 = vpop.permute.xlu0 %2835
      %2837 = vrot.lane.b32.xlu0 %v2606, 60
      %v2838 = vpop.permute.xlu0 %2837
      %2839 = vrot.lane.b32.xlu0 %v2607, 60
      %v2840 = vpop.permute.xlu0 %2839
      %2841 = vrot.lane.b32.xlu0 %v2608, 60
      %v2842 = vpop.permute.xlu0 %2841
      %2843 = vrot.lane.b32.xlu0 %v2609, 60
      %v2844 = vpop.permute.xlu0 %2843
      %2845 = vrot.lane.b32.xlu0 %v2610, 60
      %v2846 = vpop.permute.xlu0 %2845
      %2847 = vrot.lane.b32.xlu0 %v2611, 60
      %v2848 = vpop.permute.xlu0 %2847
      %2849 = vrot.lane.b32.xlu0 %v2612, 60
      %v2850 = vpop.permute.xlu0 %2849
      %2851 = vrot.lane.b32.xlu0 %v2613, 60
      %v2852 = vpop.permute.xlu0 %2851
      %v2853 = vsel %vm1951, %v2834, %v2836
      %v2854 = vsel %vm1951, %v2836, %v2838
      %v2855 = vsel %vm1951, %v2838, %v2840
      %v2856 = vsel %vm1951, %v2840, %v2842
      %v2857 = vsel %vm1951, %v2842, %v2844
      %v2858 = vsel %vm1951, %v2844, %v2846
      %v2859 = vsel %vm1951, %v2846, %v2848
      %v2860 = vsel %vm1951, %v2848, %v2850
      %v2861 = vsel %vm1951, %v2850, %v2852
      %2872 = vrot.lane.b32.xlu0 %v2604, 59
      %v2873 = vpop.permute.xlu0 %2872
      %2874 = vrot.lane.b32.xlu0 %v2605, 59
      %v2875 = vpop.permute.xlu0 %2874
      %2876 = vrot.lane.b32.xlu0 %v2606, 59
      %v2877 = vpop.permute.xlu0 %2876
      %2878 = vrot.lane.b32.xlu0 %v2607, 59
      %v2879 = vpop.permute.xlu0 %2878
      %2880 = vrot.lane.b32.xlu0 %v2608, 59
      %v2881 = vpop.permute.xlu0 %2880
      %2882 = vrot.lane.b32.xlu0 %v2609, 59
      %v2883 = vpop.permute.xlu0 %2882
      %2884 = vrot.lane.b32.xlu0 %v2610, 59
      %v2885 = vpop.permute.xlu0 %2884
      %2886 = vrot.lane.b32.xlu0 %v2611, 59
      %v2887 = vpop.permute.xlu0 %2886
      %2888 = vrot.lane.b32.xlu0 %v2612, 59
      %v2889 = vpop.permute.xlu0 %2888
      %2890 = vrot.lane.b32.xlu0 %v2613, 59
      %v2891 = vpop.permute.xlu0 %2890
      %v2892 = vsel %vm1991, %v2873, %v2875
      %v2893 = vsel %vm1991, %v2875, %v2877
      %v2894 = vsel %vm1991, %v2877, %v2879
      %v2895 = vsel %vm1991, %v2879, %v2881
      %v2896 = vsel %vm1991, %v2881, %v2883
      %v2897 = vsel %vm1991, %v2883, %v2885
      %v2898 = vsel %vm1991, %v2885, %v2887
      %v2899 = vsel %vm1991, %v2887, %v2889
      %v2900 = vsel %vm1991, %v2889, %v2891
      %2911 = vrot.lane.b32.xlu0 %v2604, 58
      %v2912 = vpop.permute.xlu0 %2911
      %2913 = vrot.lane.b32.xlu0 %v2605, 58
      %v2914 = vpop.permute.xlu0 %2913
      %2915 = vrot.lane.b32.xlu0 %v2606, 58
      %v2916 = vpop.permute.xlu0 %2915
      %2917 = vrot.lane.b32.xlu0 %v2607, 58
      %v2918 = vpop.permute.xlu0 %2917
      %2919 = vrot.lane.b32.xlu0 %v2608, 58
      %v2920 = vpop.permute.xlu0 %2919
      %2921 = vrot.lane.b32.xlu0 %v2609, 58
      %v2922 = vpop.permute.xlu0 %2921
      %2923 = vrot.lane.b32.xlu0 %v2610, 58
      %v2924 = vpop.permute.xlu0 %2923
      %2925 = vrot.lane.b32.xlu0 %v2611, 58
      %v2926 = vpop.permute.xlu0 %2925
      %2927 = vrot.lane.b32.xlu0 %v2612, 58
      %v2928 = vpop.permute.xlu0 %2927
      %2929 = vrot.lane.b32.xlu0 %v2613, 58
      %v2930 = vpop.permute.xlu0 %2929
      %v2931 = vsel %vm2031, %v2912, %v2914
      %v2932 = vsel %vm2031, %v2914, %v2916
      %v2933 = vsel %vm2031, %v2916, %v2918
      %v2934 = vsel %vm2031, %v2918, %v2920
      %v2935 = vsel %vm2031, %v2920, %v2922
      %v2936 = vsel %vm2031, %v2922, %v2924
      %v2937 = vsel %vm2031, %v2924, %v2926
      %v2938 = vsel %vm2031, %v2926, %v2928
      %v2939 = vsel %vm2031, %v2928, %v2930
      %v2950 = vpack.c.bf16 %v2644, %v2593
      %v2951 = vpack.c.bf16 %v2645, %v2594
      %v2952 = vpack.c.bf16 %v2646, %v2595
      %v2953 = vpack.c.bf16 %v2647, %v2596
      %v2954 = vpack.c.bf16 %v2648, %v2597
      %v2955 = vpack.c.bf16 %v2649, %v2598
      %v2956 = vpack.c.bf16 %v2650, %v2599
      %v2957 = vpack.c.bf16 %v2651, %v2600
      %v2958 = vpack.c.bf16 %v2652, %v2601
      %v2959 = vpack.c.bf16 %v2643, %v2602
      %v2960 = vpack.c.bf16 %v2735, %v2683
      %v2961 = vpack.c.bf16 %v2736, %v2684
      %v2962 = vpack.c.bf16 %v2737, %v2685
      %v2963 = vpack.c.bf16 %v2738, %v2686
      %v2964 = vpack.c.bf16 %v2739, %v2687
      %v2965 = vpack.c.bf16 %v2740, %v2688
      %v2966 = vpack.c.bf16 %v2741, %v2689
      %v2967 = vpack.c.bf16 %v2742, %v2690
      %v2968 = vpack.c.bf16 %v2743, %v2691
      %v2969 = vpack.c.bf16 %v2744, %v2682
      %v2970 = vpack.c.bf16 %v2795, %v2756
      %v2971 = vpack.c.bf16 %v2814, %v2775
      %v2972 = vpack.c.bf16 %v2815, %v2776
      %v2973 = vpack.c.bf16 %v2816, %v2777
      %v2974 = vpack.c.bf16 %v2817, %v2778
      %v2975 = vpack.c.bf16 %v2818, %v2779
      %v2976 = vpack.c.bf16 %v2819, %v2780
      %v2977 = vpack.c.bf16 %v2820, %v2781
      %v2978 = vpack.c.bf16 %v2821, %v2782
      %v2979 = vpack.c.bf16 %v2822, %v2783
      %v2980 = vpack.c.bf16 %v2873, %v2834
      %v2981 = vpack.c.bf16 %v2892, %v2853
      %v2982 = vpack.c.bf16 %v2893, %v2854
      %v2983 = vpack.c.bf16 %v2894, %v2855
      %v2984 = vpack.c.bf16 %v2895, %v2856
      %v2985 = vpack.c.bf16 %v2896, %v2857
      %v2986 = vpack.c.bf16 %v2897, %v2858
      %v2987 = vpack.c.bf16 %v2898, %v2859
      %v2988 = vpack.c.bf16 %v2899, %v2860
      %v2989 = vpack.c.bf16 %v2900, %v2861
      %v2990 = vpack.c.bf16 %v2912, %v2912
      %v2991 = vpack.c.bf16 %v2931, %v2931
      %v2992 = vpack.c.bf16 %v2932, %v2932
      %v2993 = vpack.c.bf16 %v2933, %v2933
      %v2994 = vpack.c.bf16 %v2934, %v2934
      %v2995 = vpack.c.bf16 %v2935, %v2935
      %v2996 = vpack.c.bf16 %v2936, %v2936
      %v2997 = vpack.c.bf16 %v2937, %v2937
      %v2998 = vpack.c.bf16 %v2938, %v2938
      %v2999 = vpack.c.bf16 %v2939, %v2939
      %3050 = vrot.lane.b32.xlu0 %v2950, 35
      %v3051 = vpop.permute.xlu0 %3050
      %3052 = vrot.lane.b32.xlu0 %v2951, 35
      %v3053 = vpop.permute.xlu0 %3052
      %3054 = vrot.lane.b32.xlu0 %v2952, 35
      %v3055 = vpop.permute.xlu0 %3054
      %3056 = vrot.lane.b32.xlu0 %v2953, 35
      %v3057 = vpop.permute.xlu0 %3056
      %3058 = vrot.lane.b32.xlu0 %v2954, 35
      %v3059 = vpop.permute.xlu0 %3058
      %3060 = vrot.lane.b32.xlu0 %v2955, 35
      %v3061 = vpop.permute.xlu0 %3060
      %3062 = vrot.lane.b32.xlu0 %v2956, 35
      %v3063 = vpop.permute.xlu0 %3062
      %3064 = vrot.lane.b32.xlu0 %v2957, 35
      %v3065 = vpop.permute.xlu0 %3064
      %3066 = vrot.lane.b32.xlu0 %v2958, 35
      %v3067 = vpop.permute.xlu0 %3066
      %3068 = vrot.lane.b32.xlu0 %v2959, 35
      %v3069 = vpop.permute.xlu0 %3068
      %3070 = vrot.lane.b32.xlu0 %v2960, 35
      %v3071 = vpop.permute.xlu0 %3070
      %3072 = vrot.lane.b32.xlu0 %v2961, 35
      %v3073 = vpop.permute.xlu0 %3072
      %3074 = vrot.lane.b32.xlu0 %v2962, 35
      %v3075 = vpop.permute.xlu0 %3074
      %3076 = vrot.lane.b32.xlu0 %v2963, 35
      %v3077 = vpop.permute.xlu0 %3076
      %3078 = vrot.lane.b32.xlu0 %v2964, 35
      %v3079 = vpop.permute.xlu0 %3078
      %3080 = vrot.lane.b32.xlu0 %v2965, 35
      %v3081 = vpop.permute.xlu0 %3080
      %3082 = vrot.lane.b32.xlu0 %v2966, 35
      %v3083 = vpop.permute.xlu0 %3082
      %3084 = vrot.lane.b32.xlu0 %v2967, 35
      %v3085 = vpop.permute.xlu0 %3084
      %3086 = vrot.lane.b32.xlu0 %v2968, 35
      %v3087 = vpop.permute.xlu0 %3086
      %3088 = vrot.lane.b32.xlu0 %v2969, 35
      %v3089 = vpop.permute.xlu0 %3088
      %3090 = vrot.lane.b32.xlu0 %v2970, 35
      %v3091 = vpop.permute.xlu0 %3090
      %3092 = vrot.lane.b32.xlu0 %v2971, 35
      %v3093 = vpop.permute.xlu0 %3092
      %3094 = vrot.lane.b32.xlu0 %v2972, 35
      %v3095 = vpop.permute.xlu0 %3094
      %3096 = vrot.lane.b32.xlu0 %v2973, 35
      %v3097 = vpop.permute.xlu0 %3096
      %3098 = vrot.lane.b32.xlu0 %v2974, 35
      %v3099 = vpop.permute.xlu0 %3098
      %3100 = vrot.lane.b32.xlu0 %v2975, 35
      %v3101 = vpop.permute.xlu0 %3100
      %3102 = vrot.lane.b32.xlu0 %v2976, 35
      %v3103 = vpop.permute.xlu0 %3102
      %3104 = vrot.lane.b32.xlu0 %v2977, 35
      %v3105 = vpop.permute.xlu0 %3104
      %3106 = vrot.lane.b32.xlu0 %v2978, 35
      %v3107 = vpop.permute.xlu0 %3106
      %3108 = vrot.lane.b32.xlu0 %v2979, 35
      %v3109 = vpop.permute.xlu0 %3108
      %3110 = vrot.lane.b32.xlu0 %v2980, 35
      %v3111 = vpop.permute.xlu0 %3110
      %3112 = vrot.lane.b32.xlu0 %v2981, 35
      %v3113 = vpop.permute.xlu0 %3112
      %3114 = vrot.lane.b32.xlu0 %v2982, 35
      %v3115 = vpop.permute.xlu0 %3114
      %3116 = vrot.lane.b32.xlu0 %v2983, 35
      %v3117 = vpop.permute.xlu0 %3116
      %3118 = vrot.lane.b32.xlu0 %v2984, 35
      %v3119 = vpop.permute.xlu0 %3118
      %3120 = vrot.lane.b32.xlu0 %v2985, 35
      %v3121 = vpop.permute.xlu0 %3120
      %3122 = vrot.lane.b32.xlu0 %v2986, 35
      %v3123 = vpop.permute.xlu0 %3122
      %3124 = vrot.lane.b32.xlu0 %v2987, 35
      %v3125 = vpop.permute.xlu0 %3124
      %3126 = vrot.lane.b32.xlu0 %v2988, 35
      %v3127 = vpop.permute.xlu0 %3126
      %3128 = vrot.lane.b32.xlu0 %v2989, 35
      %v3129 = vpop.permute.xlu0 %3128
      %3130 = vrot.lane.b32.xlu0 %v2990, 35
      %v3131 = vpop.permute.xlu0 %3130
      %3132 = vrot.lane.b32.xlu0 %v2991, 35
      %v3133 = vpop.permute.xlu0 %3132
      %3134 = vrot.lane.b32.xlu0 %v2992, 35
      %v3135 = vpop.permute.xlu0 %3134
      %3136 = vrot.lane.b32.xlu0 %v2993, 35
      %v3137 = vpop.permute.xlu0 %3136
      %3138 = vrot.lane.b32.xlu0 %v2994, 35
      %v3139 = vpop.permute.xlu0 %3138
      %3140 = vrot.lane.b32.xlu0 %v2995, 35
      %v3141 = vpop.permute.xlu0 %3140
      %3142 = vrot.lane.b32.xlu0 %v2996, 35
      %v3143 = vpop.permute.xlu0 %3142
      %3144 = vrot.lane.b32.xlu0 %v2997, 35
      %v3145 = vpop.permute.xlu0 %3144
      %3146 = vrot.lane.b32.xlu0 %v2998, 35
      %v3147 = vpop.permute.xlu0 %3146
      %3148 = vrot.lane.b32.xlu0 %v2999, 35
      %v3149 = vpop.permute.xlu0 %3148
      %v3150 = vsel %vm2251, %v3051, %v3053
      %v3151 = vsel %vm2251, %v3053, %v3055
      %v3152 = vsel %vm2251, %v3055, %v3057
      %v3153 = vsel %vm2251, %v3057, %v3059
      %v3154 = vsel %vm2251, %v3059, %v3061
      %v3155 = vsel %vm2251, %v3061, %v3063
      %v3156 = vsel %vm2251, %v3063, %v3065
      %v3157 = vsel %vm2251, %v3065, %v3067
      %v3158 = vsel %vm2251, %v3067, %v3069
      %v3159 = vsel %vm2251, %v3071, %v3073
      %v3160 = vsel %vm2251, %v3073, %v3075
      %v3161 = vsel %vm2251, %v3075, %v3077
      %v3162 = vsel %vm2251, %v3077, %v3079
      %v3163 = vsel %vm2251, %v3079, %v3081
      %v3164 = vsel %vm2251, %v3081, %v3083
      %v3165 = vsel %vm2251, %v3083, %v3085
      %v3166 = vsel %vm2251, %v3085, %v3087
      %v3167 = vsel %vm2251, %v3087, %v3089
      %v3168 = vsel %vm2251, %v3091, %v3093
      %v3169 = vsel %vm2251, %v3093, %v3095
      %v3170 = vsel %vm2251, %v3095, %v3097
      %v3171 = vsel %vm2251, %v3097, %v3099
      %v3172 = vsel %vm2251, %v3099, %v3101
      %v3173 = vsel %vm2251, %v3101, %v3103
      %v3174 = vsel %vm2251, %v3103, %v3105
      %v3175 = vsel %vm2251, %v3105, %v3107
      %v3176 = vsel %vm2251, %v3107, %v3109
      %v3177 = vsel %vm2251, %v3111, %v3113
      %v3178 = vsel %vm2251, %v3113, %v3115
      %v3179 = vsel %vm2251, %v3115, %v3117
      %v3180 = vsel %vm2251, %v3117, %v3119
      %v3181 = vsel %vm2251, %v3119, %v3121
      %v3182 = vsel %vm2251, %v3121, %v3123
      %v3183 = vsel %vm2251, %v3123, %v3125
      %v3184 = vsel %vm2251, %v3125, %v3127
      %v3185 = vsel %vm2251, %v3127, %v3129
      %v3186 = vsel %vm2251, %v3131, %v3133
      %v3187 = vsel %vm2251, %v3133, %v3135
      %v3188 = vsel %vm2251, %v3135, %v3137
      %v3189 = vsel %vm2251, %v3137, %v3139
      %v3190 = vsel %vm2251, %v3139, %v3141
      %v3191 = vsel %vm2251, %v3141, %v3143
      %v3192 = vsel %vm2251, %v3143, %v3145
      %v3193 = vsel %vm2251, %v3145, %v3147
      %v3194 = vsel %vm2251, %v3147, %v3149
      %v3236 = vsel %vm2337, %v2592, 0
      %v3239 = vsel %vm2341, %v3186, 0
      %v3242 = vsel %vm2341, %v3187, 0
      %v3245 = vsel %vm2341, %v3188, 0
      %v3248 = vsel %vm2341, %v3189, 0
      %v3251 = vsel %vm2341, %v3190, 0
      %v3254 = vsel %vm2341, %v3191, 0
      %v3257 = vsel %vm2341, %v3192, 0
      %v3260 = vsel %vm2341, %v3193, 0
      %v3263 = vsel %vm2341, %v3194, 0
      %v3266 = vsel %vm2341, %v3149, 0
      %3268 = vmatpush.bf16.msra.mxu0 0
      %3269 = vmatpush.bf16.msra.mxu0 0
      %3270 = vmatpush.bf16.msra.mxu0 0
      %3271 = vmatpush.bf16.msra.mxu0 %v3239
      %3272 = vmatpush.bf16.msra.mxu0 %v3177
      %3273 = vmatpush.bf16.msra.mxu0 %v3168
      %3274 = vmatpush.bf16.msra.mxu0 %v3159
      %3275 = vmatpush.bf16.msra.mxu0 %v3150
      %3276 = vmatmul.bf16.gmra.mxu0 %v3236
      %v3277 = vpop.f32.mrf.mxu0
      %v3278 = vadd.f32 0.0, %v3277
      %v3279 = vpop.f32.mrf.mxu0
      %3280 = vdwg.mxu0
      %3281 = vmatpush.bf16.msra.mxu0 0
      %3282 = vmatpush.bf16.msra.mxu0 0
      %3283 = vmatpush.bf16.msra.mxu0 0
      %3284 = vmatpush.bf16.msra.mxu0 %v3242
      %3285 = vmatpush.bf16.msra.mxu0 %v3178
      %3286 = vmatpush.bf16.msra.mxu0 %v3169
      %3287 = vmatpush.bf16.msra.mxu0 %v3160
      %3288 = vmatpush.bf16.msra.mxu0 %v3151
      %3289 = vmatmul.bf16.gmra.mxu0 %v3236
      %v3290 = vpop.f32.mrf.mxu0
      %v3291 = vadd.f32 0.0, %v3290
      %v3292 = vpop.f32.mrf.mxu0
      %3293 = vdwg.mxu0
      %3294 = vmatpush.bf16.msra.mxu0 0
      %3295 = vmatpush.bf16.msra.mxu0 0
      %3296 = vmatpush.bf16.msra.mxu0 0
      %3297 = vmatpush.bf16.msra.mxu0 %v3245
      %3298 = vmatpush.bf16.msra.mxu0 %v3179
      %3299 = vmatpush.bf16.msra.mxu0 %v3170
      %3300 = vmatpush.bf16.msra.mxu0 %v3161
      %3301 = vmatpush.bf16.msra.mxu0 %v3152
      %3302 = vmatmul.bf16.gmra.mxu0 %v3236
      %v3303 = vpop.f32.mrf.mxu0
      %v3304 = vadd.f32 0.0, %v3303
      %v3305 = vpop.f32.mrf.mxu0
      %3306 = vdwg.mxu0
      %3307 = vmatpush.bf16.msra.mxu0 0
      %3308 = vmatpush.bf16.msra.mxu0 0
      %3309 = vmatpush.bf16.msra.mxu0 0
      %3310 = vmatpush.bf16.msra.mxu0 %v3248
      %3311 = vmatpush.bf16.msra.mxu0 %v3180
      %3312 = vmatpush.bf16.msra.mxu0 %v3171
      %3313 = vmatpush.bf16.msra.mxu0 %v3162
      %3314 = vmatpush.bf16.msra.mxu0 %v3153
      %3315 = vmatmul.bf16.gmra.mxu0 %v3236
      %v3316 = vpop.f32.mrf.mxu0
      %v3317 = vadd.f32 0.0, %v3316
      %v3318 = vpop.f32.mrf.mxu0
      %3319 = vdwg.mxu0
      %3320 = vmatpush.bf16.msra.mxu0 0
      %3321 = vmatpush.bf16.msra.mxu0 0
      %3322 = vmatpush.bf16.msra.mxu0 0
      %3323 = vmatpush.bf16.msra.mxu0 %v3251
      %3324 = vmatpush.bf16.msra.mxu0 %v3181
      %3325 = vmatpush.bf16.msra.mxu0 %v3172
      %3326 = vmatpush.bf16.msra.mxu0 %v3163
      %3327 = vmatpush.bf16.msra.mxu0 %v3154
      %3328 = vmatmul.bf16.gmra.mxu0 %v3236
      %v3329 = vpop.f32.mrf.mxu0
      %v3330 = vadd.f32 0.0, %v3329
      %v3331 = vpop.f32.mrf.mxu0
      %3332 = vdwg.mxu0
      %3333 = vmatpush.bf16.msra.mxu0 0
      %3334 = vmatpush.bf16.msra.mxu0 0
      %3335 = vmatpush.bf16.msra.mxu0 0
      %3336 = vmatpush.bf16.msra.mxu0 %v3254
      %3337 = vmatpush.bf16.msra.mxu0 %v3182
      %3338 = vmatpush.bf16.msra.mxu0 %v3173
      %3339 = vmatpush.bf16.msra.mxu0 %v3164
      %3340 = vmatpush.bf16.msra.mxu0 %v3155
      %3341 = vmatmul.bf16.gmra.mxu0 %v3236
      %v3342 = vpop.f32.mrf.mxu0
      %v3343 = vadd.f32 0.0, %v3342
      %v3344 = vpop.f32.mrf.mxu0
      %3345 = vdwg.mxu0
      %3346 = vmatpush.bf16.msra.mxu0 0
      %3347 = vmatpush.bf16.msra.mxu0 0
      %3348 = vmatpush.bf16.msra.mxu0 0
      %3349 = vmatpush.bf16.msra.mxu0 %v3257
      %3350 = vmatpush.bf16.msra.mxu0 %v3183
      %3351 = vmatpush.bf16.msra.mxu0 %v3174
      %3352 = vmatpush.bf16.msra.mxu0 %v3165
      %3353 = vmatpush.bf16.msra.mxu0 %v3156
      %3354 = vmatmul.bf16.gmra.mxu0 %v3236
      %v3355 = vpop.f32.mrf.mxu0
      %v3356 = vadd.f32 0.0, %v3355
      %v3357 = vpop.f32.mrf.mxu0
      %3358 = vdwg.mxu0
      %3359 = vmatpush.bf16.msra.mxu0 0
      %3360 = vmatpush.bf16.msra.mxu0 0
      %3361 = vmatpush.bf16.msra.mxu0 0
      %3362 = vmatpush.bf16.msra.mxu0 %v3260
      %3363 = vmatpush.bf16.msra.mxu0 %v3184
      %3364 = vmatpush.bf16.msra.mxu0 %v3175
      %3365 = vmatpush.bf16.msra.mxu0 %v3166
      %3366 = vmatpush.bf16.msra.mxu0 %v3157
      %3367 = vmatmul.bf16.gmra.mxu0 %v3236
      %v3368 = vpop.f32.mrf.mxu0
      %v3369 = vadd.f32 0.0, %v3368
      %v3370 = vpop.f32.mrf.mxu0
      %3371 = vdwg.mxu0
      %3372 = vmatpush.bf16.msra.mxu0 0
      %3373 = vmatpush.bf16.msra.mxu0 0
      %3374 = vmatpush.bf16.msra.mxu0 0
      %3375 = vmatpush.bf16.msra.mxu0 %v3263
      %3376 = vmatpush.bf16.msra.mxu0 %v3185
      %3377 = vmatpush.bf16.msra.mxu0 %v3176
      %3378 = vmatpush.bf16.msra.mxu0 %v3167
      %3379 = vmatpush.bf16.msra.mxu0 %v3158
      %3380 = vmatmul.bf16.gmra.mxu0 %v3236
      %v3381 = vpop.f32.mrf.mxu0
      %v3382 = vadd.f32 0.0, %v3381
      %v3383 = vpop.f32.mrf.mxu0
      %3384 = vdwg.mxu0
      %3385 = vmatpush.bf16.msra.mxu0 0
      %3386 = vmatpush.bf16.msra.mxu0 0
      %3387 = vmatpush.bf16.msra.mxu0 0
      %3388 = vmatpush.bf16.msra.mxu0 %v3266
      %3389 = vmatpush.bf16.msra.mxu0 %v3129
      %3390 = vmatpush.bf16.msra.mxu0 %v3109
      %3391 = vmatpush.bf16.msra.mxu0 %v3089
      %3392 = vmatpush.bf16.msra.mxu0 %v3069
      %3393 = vmatmul.bf16.gmra.mxu0 %v3236
      %v3394 = vpop.f32.mrf.mxu0
      %v3395 = vadd.f32 0.0, %v3394
      %v3396 = vpop.f32.mrf.mxu0
      %3397 = vdwg.mxu0
      %v3398 = vld [vmem:[%s6] sm:$0xff]
      %3400 = vset.pattern.permute.xlu0 0
      %3401 = vperm.xlu0 %3400, %v3398
      %v3402 = vpop.permute.xlu0 %3401
      %v3404 = vmul.f32 %v3278, %v3402
      %v3405 = vmul.f32 %v3291, %v3402
      %v3406 = vmul.f32 %v3304, %v3402
      %v3407 = vmul.f32 %v3317, %v3402
      %v3408 = vmul.f32 %v3330, %v3402
      %v3409 = vmul.f32 %v3343, %v3402
      %v3410 = vmul.f32 %v3356, %v3402
      %v3411 = vmul.f32 %v3369, %v3402
      %v3412 = vmul.f32 %v3382, %v3402
      %v3413 = vmul.f32 %v3395, %v3402
      %v3414 = vld [vmem:[%s7] sm:$0xff]
      %3416 = vset.pattern.permute.xlu0 0
      %3417 = vperm.xlu0 %3416, %v3414
      %v3418 = vpop.permute.xlu0 %3417
      %v3420 = vadd.f32 %v3404, %v3418
      %v3421 = vadd.f32 %v3405, %v3418
      %v3422 = vadd.f32 %v3406, %v3418
      %v3423 = vadd.f32 %v3407, %v3418
      %v3424 = vadd.f32 %v3408, %v3418
      %v3425 = vadd.f32 %v3409, %v3418
      %v3426 = vadd.f32 %v3410, %v3418
      %v3427 = vadd.f32 %v3411, %v3418
      %v3428 = vadd.f32 %v3412, %v3418
      %v3429 = vadd.f32 %v3413, %v3418
      %v3430 = vmax.f32 %v3420, 0.0
      %v3431 = vmax.f32 %v3421, 0.0
      %v3432 = vmax.f32 %v3422, 0.0
      %v3433 = vmax.f32 %v3423, 0.0
      %v3434 = vmax.f32 %v3424, 0.0
      %v3435 = vmax.f32 %v3425, 0.0
      %v3436 = vmax.f32 %v3426, 0.0
      %v3437 = vmax.f32 %v3427, 0.0
      %v3438 = vmax.f32 %v3428, 0.0
      %v3439 = vmax.f32 %v3429, 0.0
      %3440 = vst [vmem:[%s332] sm:$0xff] %v3430
      %3441 = vst [vmem:[%s332 + $0x8] sm:$0xff] %v3431
      %3442 = vst [vmem:[%s332 + $0x10] sm:$0xff] %v3432
      %3443 = vst [vmem:[%s332 + $0x18] sm:$0xff] %v3433
      %3444 = vst [vmem:[%s332 + $0x20] sm:$0xff] %v3434
      %3445 = vst [vmem:[%s332 + $0x28] sm:$0xff] %v3435
      %3446 = vst [vmem:[%s332 + $0x30] sm:$0xff] %v3436
      %3447 = vst [vmem:[%s332 + $0x38] sm:$0xff] %v3437
      %3448 = vst [vmem:[%s332 + $0x40] sm:$0xff] %v3438
      %3449 = vst.msk [vmem:[%s332 + $0x48] sm:$0xff] %vm2588, %v3439
      %p3450 = scmp.lt.s32.totalorder %s20, 1
      %s3451 = scalar_select %p3450, %s20, 1
      %s3452 = smul.addr %s3451, 10
      %s3453 = smul.addr %s3452, 8
      %s3454 = scalar_lea.vmem %s9, %s3453
      // Predicated region
      $region57: #{decoder_block_forward.1} parent=55 // pred_check
        %p3455 = pneg %p232
      $region58: #{decoder_block_forward.1} parent=55 // pred_check_branch
        %3457 = sbr.rel (%p3455) target = $region60
      $region59: #{decoder_block_forward.1} parent=55 // pred_region
        _
      $region60: #{decoder_block_forward.1} parent=55 // pred_fallthru
        _
    $region56: #{decoder_block_forward.1} parent=5 // pred_fallthru
      _
    %p3458 = scmp.le.s32.totalorder 2, %s15
    // Predicated region
    $region61: #{decoder_block_forward.1} parent=5 // pred_check
      %p3459 = pneg %p3458
    $region62: #{decoder_block_forward.1} parent=5 // pred_check_branch
      %3461 = sbr.rel (%p3459) target = $region64
    $region63: #{decoder_block_forward.1} parent=5 // pred_region
      %s3462 = ssub.s32 %s15, 2
      // Predicated region
      $region65: #{decoder_block_forward.1} parent=63 // pred_check
        %p3463 = pneg %p238
      $region66: #{decoder_block_forward.1} parent=63 // pred_check_branch
        %3465 = sbr.rel (%p3463) target = $region68
      $region67: #{decoder_block_forward.1} parent=63 // pred_region
        %p3466 = scmp.lt.s32.totalorder %s21, 1
        %s3467 = scalar_select %p3466, %s21, 1
        %s3468 = smul.addr %s3467, 10
        %s3469 = smul.addr %s3468, 8
        %s3470 = scalar_lea.vmem %s9, %s3469
      $region68: #{decoder_block_forward.1} parent=63 // pred_fallthru
        _
    $region64: #{decoder_block_forward.1} parent=5 // pred_fallthru
      _
  $region6: #{decoder_block_forward.1} parent=0 // loop_footer
    %s19 = sadd.s32 1, %s15
  $region7: #{decoder_block_forward.1} parent=0 // loop_footer_branch
    %14 = sbr.rel target = $region3
  $region8: #{decoder_block_forward.1} parent=0 // loop_exit
    _

</llo_original>
